<compile_context>
chip_gen: v7x
topology: tpu7x:2x2x1
jax: 0.10.0
libtpu: 0.0.40
codegen_flags: <defaults>
</compile_context>

<pallas_src>
import functools
import math

import jax
import jax.numpy as jnp
from jax.experimental import pallas as pl
from jax.experimental.pallas import tpu as pltpu


# ----------------------------- generation-aware sizing -----------------------------

def _detect_vmem_capacity():
    try:
        info = pltpu.get_tpu_info()
        cap = getattr(info, "vmem_capacity_bytes", None)
        if cap:
            return int(cap)
    except Exception:
        pass
    return 64 * 1024 * 1024  # conservative fallback (v7x-sized)


_VMEM_CAP = _detect_vmem_capacity()
_VMEM_LIMIT = min((_VMEM_CAP * 3) // 4, 96 * 1024 * 1024)   # ~96 MiB on v5e/v6e, ~48 MiB on v7x
_LARGE_VMEM = _VMEM_CAP >= (100 << 20)

_TM_PREF = 512 if _LARGE_VMEM else 256    # row tiles (bf16 activations)
_TN_PREF = 512 if _LARGE_VMEM else 256    # output-column tiles
_TK_PREF = 1024 if _LARGE_VMEM else 512   # K-reduction tiles
_TF_PREF = 512 if _LARGE_VMEM else 256    # d_ff reduction tiles
_TS_PREF = 512 if _LARGE_VMEM else 256    # attention sequence tiles


def _pick_tile(dim, preferred, align):
    """Largest tile <= preferred that is a multiple of `align` and divides `dim`,
    or the full dim (always legal for a BlockSpec)."""
    if dim <= preferred:
        return dim
    t = (preferred // align) * align
    while t >= align:
        if dim % t == 0:
            return t
        t -= align
    return dim


# ----------------------------- fused RMSNorm + matmul -----------------------------

def _rms_matmul_kernel(x_ref, g_ref, w_ref, o_ref, h_ref, *, eps):
    # Cache the rmsnorm'd activations across output-column tiles (recomputed only at j==0).
    @pl.when(pl.program_id(1) == 0)
    def _():
        x = x_ref[...].astype(jnp.float32)                     # (tm, D)
        ms = jnp.mean(x * x, axis=-1, keepdims=True)
        h_ref[...] = (x * jax.lax.rsqrt(ms + eps) * g_ref[...]).astype(h_ref.dtype)

    o_ref[...] = jnp.dot(h_ref[...], w_ref[...],
                         preferred_element_type=jnp.float32).astype(o_ref.dtype)


def rms_matmul(x, gain, w, *, out_dtype, eps=1e-5):
    """rmsnorm(x, gain) @ w.  x: (M, D) bf16, gain: (D,) f32, w: (D, N) bf16."""
    M, D = x.shape
    _, N = w.shape

    # Keep output lane-dense / avoid an un-tiled weight block for non-128-multiple vocabs.
    Np = N
    if N > 128 and N % 128 != 0:
        Np = ((N + 127) // 128) * 128
        w = jnp.pad(w, ((0, 0), (0, Np - N)))

    tm = _pick_tile(M, _TM_PREF, 16)
    tn = _pick_tile(Np, _TN_PREF, 128)
    out = pl.pallas_call(
        functools.partial(_rms_matmul_kernel, eps=eps),
        out_shape=jax.ShapeDtypeStruct((M, Np), out_dtype),
        grid=(M // tm, Np // tn),
        in_specs=[
            pl.BlockSpec((tm, D), lambda i, j: (i, 0)),
            pl.BlockSpec((1, D), lambda i, j: (0, 0)),
            pl.BlockSpec((D, tn), lambda i, j: (0, j)),
        ],
        out_specs=pl.BlockSpec((tm, tn), lambda i, j: (i, j)),
        scratch_shapes=[pltpu.VMEM((tm, D), jnp.bfloat16)],
        compiler_params=pltpu.CompilerParams(
            dimension_semantics=("parallel", "arbitrary"),   # scratch h carries across j
            vmem_limit_bytes=_VMEM_LIMIT),
    )(x, gain.reshape(1, D), w)
    return out if Np == N else out[:, :N]


# ----------------------------- fully fused SwiGLU FFN (norm + w1/w3 + w2 + residual) ----------------

def _ffn_kernel(x_ref, g_ref, w1_ref, w3_ref, w2_ref, o_ref, h_ref, acc_ref, *, eps):
    ff = pl.program_id(1)

    @pl.when(ff == 0)
    def _():
        xf = x_ref[...].astype(jnp.float32)                    # (tm, D)
        ms = jnp.mean(xf * xf, axis=-1, keepdims=True)
        h_ref[...] = (xf * jax.lax.rsqrt(ms + eps) * g_ref[...]).astype(h_ref.dtype)
        acc_ref[...] = jnp.zeros(acc_ref.shape, acc_ref.dtype)

    h = h_ref[...]                                             # (tm, D) bf16
    a = jnp.dot(h, w1_ref[...], preferred_element_type=jnp.float32)   # (tm, tf)
    b = jnp.dot(h, w3_ref[...], preferred_element_type=jnp.float32)   # (tm, tf)
    gate = (a * jax.nn.sigmoid(a) * b).astype(jnp.bfloat16)           # SiLU(xW1) * (xW3)
    acc_ref[...] += jnp.dot(gate, w2_ref[...], preferred_element_type=jnp.float32)

    @pl.when(ff == pl.num_programs(1) - 1)
    def _():
        o_ref[...] = (acc_ref[...] + x_ref[...].astype(jnp.float32)).astype(o_ref.dtype)


def ffn_swiglu(x, gain, w1, w3, w2, *, eps=1e-5):
    """x + (silu(rmsnorm(x)@w1) * (rmsnorm(x)@w3)) @ w2, with d_ff as the reduction axis.
    The (M, Dff) gate activation never leaves VMEM."""
    M, D = x.shape
    Dff = w1.shape[1]
    tm = _pick_tile(M, _TM_PREF, 16)
    tf = _pick_tile(Dff, _TF_PREF, 128)
    return pl.pallas_call(
        functools.partial(_ffn_kernel, eps=eps),
        out_shape=jax.ShapeDtypeStruct((M, D), x.dtype),
        grid=(M // tm, Dff // tf),
        in_specs=[
            pl.BlockSpec((tm, D), lambda i, f: (i, 0)),
            pl.BlockSpec((1, D), lambda i, f: (0, 0)),
            pl.BlockSpec((D, tf), lambda i, f: (0, f)),
            pl.BlockSpec((D, tf), lambda i, f: (0, f)),
            pl.BlockSpec((tf, D), lambda i, f: (f, 0)),
        ],
        out_specs=pl.BlockSpec((tm, D), lambda i, f: (i, 0)),
        scratch_shapes=[pltpu.VMEM((tm, D), jnp.bfloat16),     # cached rmsnorm'd h
                        pltpu.VMEM((tm, D), jnp.float32)],     # output accumulator
        compiler_params=pltpu.CompilerParams(
            dimension_semantics=("parallel", "arbitrary"),
            vmem_limit_bytes=_VMEM_LIMIT),
    )(x, gain.reshape(1, D), w1, w3, w2)


# ----------------------------- K-tiled matmul with fused residual add -----------------------------

def _matmul_res_kernel(x_ref, w_ref, r_ref, o_ref, acc_ref):
    @pl.when(pl.program_id(2) == 0)
    def _():
        acc_ref[...] = jnp.zeros(acc_ref.shape, acc_ref.dtype)

    acc_ref[...] += jnp.dot(x_ref[...], w_ref[...],
                            preferred_element_type=jnp.float32)

    @pl.when(pl.program_id(2) == pl.num_programs(2) - 1)
    def _():
        o_ref[...] = (acc_ref[...] + r_ref[...].astype(jnp.float32)).astype(o_ref.dtype)


def matmul_residual(x, w, res):
    """x @ w + res, with K-reduction tiling and the residual fused into the epilogue."""
    M, K = x.shape
    _, N = w.shape
    tm = _pick_tile(M, _TM_PREF, 16)
    tn = _pick_tile(N, _TN_PREF, 128)
    tk = _pick_tile(K, _TK_PREF, 128)
    return pl.pallas_call(
        _matmul_res_kernel,
        out_shape=jax.ShapeDtypeStruct((M, N), res.dtype),
        grid=(M // tm, N // tn, K // tk),
        in_specs=[
            pl.BlockSpec((tm, tk), lambda i, j, k: (i, k)),
            pl.BlockSpec((tk, tn), lambda i, j, k: (k, j)),
            pl.BlockSpec((tm, tn), lambda i, j, k: (i, j)),
        ],
        out_specs=pl.BlockSpec((tm, tn), lambda i, j, k: (i, j)),
        scratch_shapes=[pltpu.VMEM((tm, tn), jnp.float32)],
        compiler_params=pltpu.CompilerParams(
            dimension_semantics=("parallel", "parallel", "arbitrary"),
            vmem_limit_bytes=_VMEM_LIMIT),
    )(x, w, res)


# ----------------------------- one-pass RoPE on q/k -----------------------------
# q/k features are pre-de-interleaved per head (even indices first, odd indices second)
# by permuting the Wq/Wk columns at weight-prep time.  Attention scores are invariant to
# that consistent permutation, and the interleaved-pair RoPE becomes the rotate-half form:
#   out = [x1*cos - x2*sin | x1*sin + x2*cos]

def _rope_kernel(q_ref, k_ref, cos_ref, sin_ref, qo_ref, ko_ref):
    cos = cos_ref[...]                                         # (t, Dh//2) f32
    sin = sin_ref[...]

    def rot(x):
        xf = x.astype(jnp.float32)
        half = xf.shape[-1] // 2
        x1 = xf[:, :half]
        x2 = xf[:, half:]
        return jnp.concatenate([x1 * cos - x2 * sin, x1 * sin + x2 * cos],
                               axis=-1).astype(x.dtype)

    qo_ref[0] = rot(q_ref[0])
    ko_ref[0] = rot(k_ref[0])


def apply_rope(q, k, cos, sin):
    """q, k: (B*H, S, Dh) bf16 (de-interleaved per head); cos/sin: (S, Dh//2) f32."""
    BH, S, Dh = q.shape
    half = Dh // 2
    t = _pick_tile(S, _TS_PREF, 16)
    return pl.pallas_call(
        _rope_kernel,
        out_shape=(jax.ShapeDtypeStruct(q.shape, q.dtype),
                   jax.ShapeDtypeStruct(k.shape, k.dtype)),
        grid=(BH, S // t),
        in_specs=[
            pl.BlockSpec((1, t, Dh), lambda b, i: (b, i, 0)),
            pl.BlockSpec((1, t, Dh), lambda b, i: (b, i, 0)),
            pl.BlockSpec((t, half), lambda b, i: (i, 0)),
            pl.BlockSpec((t, half), lambda b, i: (i, 0)),
        ],
        out_specs=(pl.BlockSpec((1, t, Dh), lambda b, i: (b, i, 0)),
                   pl.BlockSpec((1, t, Dh), lambda b, i: (b, i, 0))),
        compiler_params=pltpu.CompilerParams(
            dimension_semantics=("parallel", "parallel"),
            vmem_limit_bytes=_VMEM_LIMIT),
    )(q, k, cos, sin)


# ----------------------------- flash causal attention -----------------------------

def _flash_attn_kernel(q_ref, k_ref, v_ref, o_ref, m_sc, l_sc, acc_sc):
    qi = pl.program_id(1)
    kvi = pl.program_id(2)

    @pl.when(kvi == 0)
    def _():
        m_sc[...] = jnp.full(m_sc.shape, -1e30, m_sc.dtype)
        l_sc[...] = jnp.zeros(l_sc.shape, l_sc.dtype)
        acc_sc[...] = jnp.zeros(acc_sc.shape, acc_sc.dtype)

    # Skip compute on KV tiles that are entirely above the causal diagonal.  Their DMA is
    # also skipped because the K/V index_maps clamp the block index to min(kvi, qi).
    @pl.when(kvi <= qi)
    def _():
        q = q_ref[0]                                           # (tq, Dh) bf16 (pre-rotated, pre-scaled)
        k = k_ref[0]                                           # (tkv, Dh) bf16 (pre-rotated)
        # q @ k^T without an explicit transpose: contract dim 1 of q with dim 1 of k.
        s = jax.lax.dot_general(q, k, (((1,), (1,)), ((), ())),
                                preferred_element_type=jnp.float32)   # (tq, tkv)
        tq, tkv = s.shape
        row = qi * tq + jax.lax.broadcasted_iota(jnp.int32, (tq, tkv), 0)
        col = kvi * tkv + jax.lax.broadcasted_iota(jnp.int32, (tq, tkv), 1)
        s = jnp.where(col <= row, s, -1e30)                    # finite mask (no -inf NaN risk)

        m_prev = m_sc[...]
        m_new = jnp.maximum(m_prev, jnp.max(s, axis=-1, keepdims=True))
        alpha = jnp.exp(m_prev - m_new)
        p = jnp.exp(s - m_new)
        l_sc[...] = alpha * l_sc[...] + jnp.sum(p, axis=-1, keepdims=True)
        acc_sc[...] = alpha * acc_sc[...] + jnp.dot(
            p.astype(v_ref.dtype), v_ref[0], preferred_element_type=jnp.float32)
        m_sc[...] = m_new

    @pl.when(kvi == pl.num_programs(2) - 1)
    def _():
        o_ref[0] = (acc_sc[...] *
                    pl.reciprocal(l_sc[...], approx=True)).astype(o_ref.dtype)


def flash_causal_attention(q, k, v):
    """q, k, v: (B*H, S, Dh) bf16 -> (B*H, S, Dh) bf16, causal."""
    BH, S, Dh = q.shape
    t = _pick_tile(S, _TS_PREF, 16)
    nq = S // t
    nkv = S // t
    return pl.pallas_call(
        _flash_attn_kernel,
        out_shape=jax.ShapeDtypeStruct((BH, S, Dh), q.dtype),
        grid=(BH, nq, nkv),
        in_specs=[
            pl.BlockSpec((1, t, Dh), lambda b, i, j: (b, i, 0)),                   # q
            pl.BlockSpec((1, t, Dh), lambda b, i, j: (b, jnp.minimum(j, i), 0)),   # k (clamped)
            pl.BlockSpec((1, t, Dh), lambda b, i, j: (b, jnp.minimum(j, i), 0)),   # v (clamped)
        ],
        out_specs=pl.BlockSpec((1, t, Dh), lambda b, i, j: (b, i, 0)),
        scratch_shapes=[
            pltpu.VMEM((t, 1), jnp.float32),    # running max m
            pltpu.VMEM((t, 1), jnp.float32),    # running denom l
            pltpu.VMEM((t, Dh), jnp.float32),   # output accumulator
        ],
        compiler_params=pltpu.CompilerParams(
            dimension_semantics=("parallel", "parallel", "arbitrary"),
            vmem_limit_bytes=_VMEM_LIMIT),
    )(q, k, v)


# ----------------------------- host-side helpers -----------------------------

def rope_tables(S, Dh, theta):
    """cos/sin tables of shape (S, Dh//2) for the pair rotation (pair i uses freq theta^(-2i/Dh))."""
    half = Dh // 2
    pos = jnp.arange(S, dtype=jnp.float32)[:, None]
    inv_freq = theta ** (-(jnp.arange(half, dtype=jnp.float32) * 2.0 / Dh))
    ang = pos * inv_freq[None, :]                              # (S, half)
    return jnp.cos(ang), jnp.sin(ang)


def init_params(key, vocab_size, d_model, num_layers, num_heads, d_ff):
    def nrm(k, shape, scale=0.02):
        return (scale * jax.random.normal(k, shape, dtype=jnp.float32)).astype(jnp.bfloat16)

    keys = jax.random.split(key, 2 + num_layers)
    params = {
        "embedding": nrm(keys[0], (vocab_size, d_model)),
        "lm_head": nrm(keys[1], (d_model, vocab_size)),
        "ln_f": jnp.ones((d_model,), jnp.float32),
        "layers": [],
    }
    for l in range(num_layers):
        lk = jax.random.split(keys[2 + l], 5)
        params["layers"].append({
            "ln1": jnp.ones((d_model,), jnp.float32),
            "ln2": jnp.ones((d_model,), jnp.float32),
            "wqkv": nrm(lk[0], (d_model, 3 * d_model)),   # fused [wq | wk | wv]
            "wo": nrm(lk[1], (d_model, d_model)),
            "w1": nrm(lk[2], (d_model, d_ff)),
            "w3": nrm(lk[3], (d_model, d_ff)),
            "w2": nrm(lk[4], (d_ff, d_model)),
        })
    return params


def prepare_params(params, *, d_model, num_heads):
    """One-time weight prep (outside jit):
      * de-interleave Wq/Wk columns per head (even features first) so RoPE becomes rotate-half,
      * fold the 1/sqrt(Dh) attention scale into Wq.
    Attention scores/output are mathematically unchanged."""
    D = d_model
    H = num_heads
    Dh = D // H
    scale = 1.0 / math.sqrt(Dh)
    perm_head = jnp.concatenate([jnp.arange(0, Dh, 2), jnp.arange(1, Dh, 2)])
    perm = (jnp.arange(H)[:, None] * Dh + perm_head[None, :]).reshape(-1)      # (D,)

    new_layers = []
    for layer in params["layers"]:
        wqkv = layer["wqkv"]
        wq = (wqkv[:, :D].astype(jnp.float32) * scale).astype(wqkv.dtype)[:, perm]
        wk = wqkv[:, D:2 * D][:, perm]
        wv = wqkv[:, 2 * D:]
        nl = dict(layer)
        nl["wqkv"] = jnp.concatenate([wq, wk, wv], axis=1)
        new_layers.append(nl)
    out = dict(params)
    out["layers"] = new_layers
    return out


def transformer_lm_forward(token_ids, params, *, d_model, num_heads, rope_theta, vocab_size):
    B, S = token_ids.shape
    H = num_heads
    Dh = d_model // H

    # TODO(synk): embedding gather kept in plain JAX (a Pallas gather needs scalar-prefetch
    # row indexing and is not the hot path at these shapes).
    x = params["embedding"][token_ids].reshape(B * S, d_model).astype(jnp.bfloat16)

    cos, sin = rope_tables(S, Dh, rope_theta)

    for layer in params["layers"]:
        # --- attention sublayer (pre-norm, RMSNorm fused into the QKV matmul) ---
        qkv = rms_matmul(x, layer["ln1"], layer["wqkv"], out_dtype=jnp.bfloat16)  # (B*S, 3D)

        # TODO(synk): head split/merge transposes remain XLA glue; folding them into the
        # attention BlockSpec index_maps needs lane-dense (>=128) head dims.
        qkv = qkv.reshape(B, S, 3, H, Dh).transpose(2, 0, 3, 1, 4).reshape(3, B * H, S, Dh)
        q, k, v = qkv[0], qkv[1], qkv[2]

        q, k = apply_rope(q, k, cos, sin)                                         # one-pass RoPE
        attn = flash_causal_attention(q, k, v)                                    # (B*H, S, Dh)
        attn = attn.reshape(B, H, S, Dh).transpose(0, 2, 1, 3).reshape(B * S, d_model)

        x = matmul_residual(attn, layer["wo"], x)                                 # += residual

        # --- feed-forward sublayer: norm + SwiGLU + down-proj + residual, one fused kernel ---
        x = ffn_swiglu(x, layer["ln2"], layer["w1"], layer["w3"], layer["w2"])

    # final RMSNorm fused into the lm_head matmul; logits in f32
    logits = rms_matmul(x, params["ln_f"], params["lm_head"], out_dtype=jnp.float32)
    return logits.reshape(B, S, vocab_size)


# ----------------------------- main -----------------------------

if __name__ == "__main__":
    # Small synthetic config consistent with the module's constructor.
    vocab_size = 64
    context_length = 16
    d_model = 32
    num_layers = 2
    num_heads = 4
    d_ff = 64
    rope_theta = 10000.0

    batch, seq = 2, 8

    key = jax.random.PRNGKey(0)
    k_tok, k_par = jax.random.split(key)
    token_ids = jax.random.randint(k_tok, (batch, seq), 0, vocab_size, dtype=jnp.int32)
    params = init_params(k_par, vocab_size, d_model, num_layers, num_heads, d_ff)
    params = prepare_params(params, d_model=d_model, num_heads=num_heads)

    forward = jax.jit(functools.partial(
        transformer_lm_forward,
        d_model=d_model, num_heads=num_heads,
        rope_theta=rope_theta, vocab_size=vocab_size))

    logits = forward(token_ids, params)
    logits = jax.block_until_ready(logits)

    assert logits.shape == (batch, seq, vocab_size)
    assert logits.dtype == jnp.float32
    assert bool(jnp.all(jnp.isfinite(logits)))
    print("KERNEL_OK")
</pallas_src>

<mosaic_0001>
module attributes {stable_mosaic.version = 11 : i64} {
  func.func @_rope_kernel(%arg0: i32, %arg1: i32, %arg2: memref<1x8x8xbf16, #tpu.memory_space<vmem>>, %arg3: memref<1x8x8xbf16, #tpu.memory_space<vmem>>, %arg4: memref<8x4xf32, #tpu.memory_space<vmem>>, %arg5: memref<8x4xf32, #tpu.memory_space<vmem>>, %arg6: memref<1x8x8xbf16, #tpu.memory_space<vmem>>, %arg7: memref<1x8x8xbf16, #tpu.memory_space<vmem>>) attributes {dimension_semantics = [#tpu.dimension_semantics<parallel>, #tpu.dimension_semantics<parallel>], iteration_bounds = array<i64: 8, 1>, scalar_prefetch = 0 : i64, scratch_operands = 0 : i64, tpu.core_type = #tpu.core_type<tc>, window_params = [{transform_indices = @transform_0, window_bounds = array<i64: 1, 8, 8>}, {transform_indices = @transform_1, window_bounds = array<i64: 1, 8, 8>}, {transform_indices = @transform_2, window_bounds = array<i64: 8, 4>}, {transform_indices = @transform_3, window_bounds = array<i64: 8, 4>}, {transform_indices = @transform_4, window_bounds = array<i64: 1, 8, 8>}, {transform_indices = @transform_5, window_bounds = array<i64: 1, 8, 8>}]} {
    %c0 = arith.constant 0 : index
    %c0_0 = arith.constant 0 : index
    %0 = vector.load %arg4[%c0, %c0_0] : memref<8x4xf32, #tpu.memory_space<vmem>>, vector<8x4xf32>
    %c0_1 = arith.constant 0 : index
    %c0_2 = arith.constant 0 : index
    %1 = vector.load %arg5[%c0_1, %c0_2] : memref<8x4xf32, #tpu.memory_space<vmem>>, vector<8x4xf32>
    %c0_3 = arith.constant 0 : index
    %c0_4 = arith.constant 0 : index
    %c0_5 = arith.constant 0 : index
    %2 = vector.load %arg2[%c0_3, %c0_4, %c0_5] : memref<1x8x8xbf16, #tpu.memory_space<vmem>>, vector<1x8x8xbf16>
    %3 = vector.shape_cast %2 : vector<1x8x8xbf16> to vector<8x8xbf16>
    %4 = arith.extf %3 : vector<8x8xbf16> to vector<8x8xf32>
    %5 = vector.extract_strided_slice %4 {offsets = [0, 0], sizes = [8, 4], strides = [1, 1]} : vector<8x8xf32> to vector<8x4xf32>
    %6 = vector.extract_strided_slice %4 {offsets = [0, 4], sizes = [8, 4], strides = [1, 1]} : vector<8x8xf32> to vector<8x4xf32>
    %7 = arith.mulf %5, %0 : vector<8x4xf32>
    %8 = arith.mulf %6, %1 : vector<8x4xf32>
    %9 = arith.subf %7, %8 : vector<8x4xf32>
    %10 = arith.mulf %5, %1 : vector<8x4xf32>
    %11 = arith.mulf %6, %0 : vector<8x4xf32>
    %12 = arith.addf %10, %11 : vector<8x4xf32>
    %13 = tpu.concatenate %9, %12 in 1 : vector<8x4xf32>, vector<8x4xf32> -> vector<8x8xf32>
    %14 = arith.truncf %13 : vector<8x8xf32> to vector<8x8xbf16>
    %c0_6 = arith.constant 0 : index
    %c0_7 = arith.constant 0 : index
    %c0_8 = arith.constant 0 : index
    %15 = vector.load %arg6[%c0_6, %c0_7, %c0_8] : memref<1x8x8xbf16, #tpu.memory_space<vmem>>, vector<1x8x8xbf16>
    %16 = vector.shape_cast %15 : vector<1x8x8xbf16> to vector<8x8xbf16>
    %17 = vector.shape_cast %14 : vector<8x8xbf16> to vector<1x8x8xbf16>
    tpu.vector_store %arg6[%c0_6, %c0_7, %c0_8], %17 {strides = array<i32>} : memref<1x8x8xbf16, #tpu.memory_space<vmem>>, vector<1x8x8xbf16>,
    %c0_9 = arith.constant 0 : index
    %c0_10 = arith.constant 0 : index
    %c0_11 = arith.constant 0 : index
    %18 = vector.load %arg3[%c0_9, %c0_10, %c0_11] : memref<1x8x8xbf16, #tpu.memory_space<vmem>>, vector<1x8x8xbf16>
    %19 = vector.shape_cast %18 : vector<1x8x8xbf16> to vector<8x8xbf16>
    %20 = arith.extf %19 : vector<8x8xbf16> to vector<8x8xf32>
    %21 = vector.extract_strided_slice %20 {offsets = [0, 0], sizes = [8, 4], strides = [1, 1]} : vector<8x8xf32> to vector<8x4xf32>
    %22 = vector.extract_strided_slice %20 {offsets = [0, 4], sizes = [8, 4], strides = [1, 1]} : vector<8x8xf32> to vector<8x4xf32>
    %23 = arith.mulf %21, %0 : vector<8x4xf32>
    %24 = arith.mulf %22, %1 : vector<8x4xf32>
    %25 = arith.subf %23, %24 : vector<8x4xf32>
    %26 = arith.mulf %21, %1 : vector<8x4xf32>
    %27 = arith.mulf %22, %0 : vector<8x4xf32>
    %28 = arith.addf %26, %27 : vector<8x4xf32>
    %29 = tpu.concatenate %25, %28 in 1 : vector<8x4xf32>, vector<8x4xf32> -> vector<8x8xf32>
    %30 = arith.truncf %29 : vector<8x8xf32> to vector<8x8xbf16>
    %c0_12 = arith.constant 0 : index
    %c0_13 = arith.constant 0 : index
    %c0_14 = arith.constant 0 : index
    %31 = vector.load %arg7[%c0_12, %c0_13, %c0_14] : memref<1x8x8xbf16, #tpu.memory_space<vmem>>, vector<1x8x8xbf16>
    %32 = vector.shape_cast %31 : vector<1x8x8xbf16> to vector<8x8xbf16>
    %33 = vector.shape_cast %30 : vector<8x8xbf16> to vector<1x8x8xbf16>
    tpu.vector_store %arg7[%c0_12, %c0_13, %c0_14], %33 {strides = array<i32>} : memref<1x8x8xbf16, #tpu.memory_space<vmem>>, vector<1x8x8xbf16>,
    return
  }
  func.func @transform_0(%arg0: i32, %arg1: i32) -> (i32, i32, i32) {
    %c0_i32 = arith.constant 0 : i32
    %c0_i32_0 = arith.constant 0 : i32
    return %arg0, %arg1, %c0_i32 : i32, i32, i32
  }
  func.func @transform_1(%arg0: i32, %arg1: i32) -> (i32, i32, i32) {
    %c0_i32 = arith.constant 0 : i32
    %c0_i32_0 = arith.constant 0 : i32
    return %arg0, %arg1, %c0_i32 : i32, i32, i32
  }
  func.func @transform_2(%arg0: i32, %arg1: i32) -> (i32, i32) {
    %c0_i32 = arith.constant 0 : i32
    %c0_i32_0 = arith.constant 0 : i32
    return %arg1, %c0_i32 : i32, i32
  }
  func.func @transform_3(%arg0: i32, %arg1: i32) -> (i32, i32) {
    %c0_i32 = arith.constant 0 : i32
    %c0_i32_0 = arith.constant 0 : i32
    return %arg1, %c0_i32 : i32, i32
  }
  func.func @transform_4(%arg0: i32, %arg1: i32) -> (i32, i32, i32) {
    %c0_i32 = arith.constant 0 : i32
    %c0_i32_0 = arith.constant 0 : i32
    return %arg0, %arg1, %c0_i32 : i32, i32, i32
  }
  func.func @transform_5(%arg0: i32, %arg1: i32) -> (i32, i32, i32) {
    %c0_i32 = arith.constant 0 : i32
    %c0_i32_0 = arith.constant 0 : i32
    return %arg0, %arg1, %c0_i32 : i32, i32, i32
  }
}

module attributes {stable_mosaic.version = 11 : i64} {
  func.func @_rms_matmul_kernel(%arg0: i32, %arg1: i32, %arg2: memref<16x32xbf16, #tpu.memory_space<vmem>>, %arg3: memref<1x32xf32, #tpu.memory_space<vmem>>, %arg4: memref<32x96xbf16, #tpu.memory_space<vmem>>, %arg5: memref<16x96xbf16, #tpu.memory_space<vmem>>, %arg6: memref<16x32xbf16, #tpu.memory_space<vmem>>) attributes {dimension_semantics = [#tpu.dimension_semantics<parallel>, #tpu.dimension_semantics<arbitrary>], iteration_bounds = array<i64: 1, 1>, scalar_prefetch = 0 : i64, scratch_operands = 1 : i64, tpu.core_type = #tpu.core_type<tc>, window_params = [{transform_indices = @transform_0, window_bounds = array<i64: 16, 32>}, {pipeline_mode = #tpu.pipeline_mode<synchronous>, transform_indices = @transform_1, window_bounds = array<i64: 1, 32>}, {transform_indices = @transform_2, window_bounds = array<i64: 32, 96>}, {transform_indices = @transform_3, window_bounds = array<i64: 16, 96>}]} {
    %c0_i32 = arith.constant 0 : i32
    %0 = arith.cmpi eq, %arg1, %c0_i32 : i32
    %1 = arith.extui %0 : i1 to i32
    %c0_i32_0 = arith.constant 0 : i32
    %2 = arith.cmpi ne, %1, %c0_i32_0 : i32
    scf.if %2 {
      %c0_6 = arith.constant 0 : index
      %c0_7 = arith.constant 0 : index
      %8 = vector.load %arg2[%c0_6, %c0_7] : memref<16x32xbf16, #tpu.memory_space<vmem>>, vector<16x32xbf16>
      %9 = arith.extf %8 : vector<16x32xbf16> to vector<16x32xf32>
      %10 = arith.mulf %9, %9 : vector<16x32xf32>
      %cst_8 = arith.constant dense<0.000000e+00> : vector<16xf32>
      %11 = vector.multi_reduction <add>, %10, %cst_8 [1] : vector<16x32xf32> to vector<16xf32>
      %12 = vector.shape_cast %11 : vector<16xf32> to vector<16x1xf32>
      %cst_9 = arith.constant 3.200000e+01 : f32
      %13 = vector.broadcast %cst_9 : f32 to vector<16x1xf32>
      %14 = arith.divf %12, %13 : vector<16x1xf32>
      %cst_10 = arith.constant 9.99999974E-6 : f32
      %15 = vector.broadcast %cst_10 : f32 to vector<16x1xf32>
      %16 = arith.addf %14, %15 : vector<16x1xf32>
      %17 = math.rsqrt %16 : vector<16x1xf32>
      %18 = vector.broadcast %17 : vector<16x1xf32> to vector<16x32xf32>
      %19 = arith.mulf %9, %18 : vector<16x32xf32>
      %c0_11 = arith.constant 0 : index
      %c0_12 = arith.constant 0 : index
      %20 = vector.load %arg3[%c0_11, %c0_12] : memref<1x32xf32, #tpu.memory_space<vmem>>, vector<1x32xf32>
      %21 = vector.broadcast %20 : vector<1x32xf32> to vector<16x32xf32>
      %22 = arith.mulf %19, %21 : vector<16x32xf32>
      %23 = arith.truncf %22 : vector<16x32xf32> to vector<16x32xbf16>
      %c0_13 = arith.constant 0 : index
      %c0_14 = arith.constant 0 : index
      %24 = vector.load %arg6[%c0_13, %c0_14] : memref<16x32xbf16, #tpu.memory_space<vmem>>, vector<16x32xbf16>
      tpu.vector_store %arg6[%c0_13, %c0_14], %23 {strides = array<i32>} : memref<16x32xbf16, #tpu.memory_space<vmem>>, vector<16x32xbf16>,
    } else {
    }
    %c0 = arith.constant 0 : index
    %c0_1 = arith.constant 0 : index
    %3 = vector.load %arg6[%c0, %c0_1] : memref<16x32xbf16, #tpu.memory_space<vmem>>, vector<16x32xbf16>
    %c0_2 = arith.constant 0 : index
    %c0_3 = arith.constant 0 : index
    %4 = vector.load %arg4[%c0_2, %c0_3] : memref<32x96xbf16, #tpu.memory_space<vmem>>, vector<32x96xbf16>
    %cst = arith.constant dense<0.000000e+00> : vector<16x96xf32>
    %5 = tpu.matmul %3, %4, %cst {dimension_numbers = #tpu.dot_dimension_numbers<[1], [0], [0], [1], [0, 0, 1, 1], [], []>} : vector<16x32xbf16>, vector<32x96xbf16>, vector<16x96xf32> -> vector<16x96xf32>
    %6 = arith.truncf %5 : vector<16x96xf32> to vector<16x96xbf16>
    %c0_4 = arith.constant 0 : index
    %c0_5 = arith.constant 0 : index
    %7 = vector.load %arg5[%c0_4, %c0_5] : memref<16x96xbf16, #tpu.memory_space<vmem>>, vector<16x96xbf16>
    tpu.vector_store %arg5[%c0_4, %c0_5], %6 {strides = array<i32>} : memref<16x96xbf16, #tpu.memory_space<vmem>>, vector<16x96xbf16>,
    return
  }
  func.func @transform_0(%arg0: i32, %arg1: i32) -> (i32, i32) {
    %c0_i32 = arith.constant 0 : i32
    %c0_i32_0 = arith.constant 0 : i32
    return %arg0, %c0_i32 : i32, i32
  }
  func.func @transform_1(%arg0: i32, %arg1: i32) -> (i32, i32) {
    %c0_i32 = arith.constant 0 : i32
    %c0_i32_0 = arith.constant 0 : i32
    %c0_i32_1 = arith.constant 0 : i32
    return %c0_i32, %c0_i32_0 : i32, i32
  }
  func.func @transform_2(%arg0: i32, %arg1: i32) -> (i32, i32) {
    %c0_i32 = arith.constant 0 : i32
    %c0_i32_0 = arith.constant 0 : i32
    return %c0_i32, %arg1 : i32, i32
  }
  func.func @transform_3(%arg0: i32, %arg1: i32) -> (i32, i32) {
    %c0_i32 = arith.constant 0 : i32
    return %arg0, %arg1 : i32, i32
  }
}

module attributes {stable_mosaic.version = 11 : i64} {
  func.func @_flash_attn_kernel(%arg0: i32, %arg1: i32, %arg2: i32, %arg3: memref<1x8x8xbf16, #tpu.memory_space<vmem>>, %arg4: memref<1x8x8xbf16, #tpu.memory_space<vmem>>, %arg5: memref<1x8x8xbf16, #tpu.memory_space<vmem>>, %arg6: memref<1x8x8xbf16, #tpu.memory_space<vmem>>, %arg7: memref<8x1xf32, #tpu.memory_space<vmem>>, %arg8: memref<8x1xf32, #tpu.memory_space<vmem>>, %arg9: memref<8x8xf32, #tpu.memory_space<vmem>>) attributes {dimension_semantics = [#tpu.dimension_semantics<parallel>, #tpu.dimension_semantics<parallel>, #tpu.dimension_semantics<arbitrary>], iteration_bounds = array<i64: 8, 1, 1>, scalar_prefetch = 0 : i64, scratch_operands = 3 : i64, tpu.core_type = #tpu.core_type<tc>, window_params = [{transform_indices = @transform_0, window_bounds = array<i64: 1, 8, 8>}, {transform_indices = @transform_1, window_bounds = array<i64: 1, 8, 8>}, {transform_indices = @transform_2, window_bounds = array<i64: 1, 8, 8>}, {transform_indices = @transform_3, window_bounds = array<i64: 1, 8, 8>}]} {
    %c0_i32 = arith.constant 0 : i32
    %0 = arith.cmpi eq, %arg2, %c0_i32 : i32
    %1 = arith.extui %0 : i1 to i32
    %c0_i32_0 = arith.constant 0 : i32
    %2 = arith.cmpi ne, %1, %c0_i32_0 : i32
    scf.if %2 {
      %cst = arith.constant -1.000000e+30 : f32
      %9 = vector.broadcast %cst : f32 to vector<8x1xf32>
      %c0 = arith.constant 0 : index
      %c0_4 = arith.constant 0 : index
      %10 = vector.load %arg7[%c0, %c0_4] : memref<8x1xf32, #tpu.memory_space<vmem>>, vector<8x1xf32>
      tpu.vector_store %arg7[%c0, %c0_4], %9 {strides = array<i32>} : memref<8x1xf32, #tpu.memory_space<vmem>>, vector<8x1xf32>,
      %cst_5 = arith.constant 0.000000e+00 : f32
      %11 = vector.broadcast %cst_5 : f32 to vector<8x1xf32>
      %c0_6 = arith.constant 0 : index
      %c0_7 = arith.constant 0 : index
      %12 = vector.load %arg8[%c0_6, %c0_7] : memref<8x1xf32, #tpu.memory_space<vmem>>, vector<8x1xf32>
      tpu.vector_store %arg8[%c0_6, %c0_7], %11 {strides = array<i32>} : memref<8x1xf32, #tpu.memory_space<vmem>>, vector<8x1xf32>,
      %cst_8 = arith.constant 0.000000e+00 : f32
      %13 = vector.broadcast %cst_8 : f32 to vector<8x8xf32>
      %c0_9 = arith.constant 0 : index
      %c0_10 = arith.constant 0 : index
      %14 = vector.load %arg9[%c0_9, %c0_10] : memref<8x8xf32, #tpu.memory_space<vmem>>, vector<8x8xf32>
      tpu.vector_store %arg9[%c0_9, %c0_10], %13 {strides = array<i32>} : memref<8x8xf32, #tpu.memory_space<vmem>>, vector<8x8xf32>,
    } else {
    }
    %3 = arith.cmpi sle, %arg2, %arg1 : i32
    %4 = arith.extui %3 : i1 to i32
    %c0_i32_1 = arith.constant 0 : i32
    %5 = arith.cmpi ne, %4, %c0_i32_1 : i32
    scf.if %5 {
      %c0 = arith.constant 0 : index
      %c0_4 = arith.constant 0 : index
      %c0_5 = arith.constant 0 : index
      %9 = vector.load %arg3[%c0, %c0_4, %c0_5] : memref<1x8x8xbf16, #tpu.memory_space<vmem>>, vector<1x8x8xbf16>
      %10 = vector.shape_cast %9 : vector<1x8x8xbf16> to vector<8x8xbf16>
      %c0_6 = arith.constant 0 : index
      %c0_7 = arith.constant 0 : index
      %c0_8 = arith.constant 0 : index
      %11 = vector.load %arg4[%c0_6, %c0_7, %c0_8] : memref<1x8x8xbf16, #tpu.memory_space<vmem>>, vector<1x8x8xbf16>
      %12 = vector.shape_cast %11 : vector<1x8x8xbf16> to vector<8x8xbf16>
      %cst = arith.constant dense<0.000000e+00> : vector<8x8xf32>
      %13 = tpu.matmul %10, %12, %cst {dimension_numbers = #tpu.dot_dimension_numbers<[1], [1], [0], [0], [0, 0, 1, 0], [], []>} : vector<8x8xbf16>, vector<8x8xbf16>, vector<8x8xf32> -> vector<8x8xf32>
      %c8_i32 = arith.constant 8 : i32
      %14 = arith.muli %arg1, %c8_i32 : i32
      %15 = tpu.iota {dimensions = array<i32: 0>} : vector<8x8xi32>
      %16 = vector.broadcast %14 : i32 to vector<8x8xi32>
      %17 = arith.addi %16, %15 : vector<8x8xi32>
      %c8_i32_9 = arith.constant 8 : i32
      %18 = arith.muli %arg2, %c8_i32_9 : i32
      %19 = tpu.iota {dimensions = array<i32: 1>} : vector<8x8xi32>
      %20 = vector.broadcast %18 : i32 to vector<8x8xi32>
      %21 = arith.addi %20, %19 : vector<8x8xi32>
      %22 = arith.cmpi sle, %21, %17 : vector<8x8xi32>
      %cst_10 = arith.constant -1.000000e+30 : f32
      %23 = vector.broadcast %cst_10 : f32 to vector<8x8xf32>
      %24 = arith.select %22, %13, %23 : vector<8x8xi1>, vector<8x8xf32>
      %c0_11 = arith.constant 0 : index
      %c0_12 = arith.constant 0 : index
      %25 = vector.load %arg7[%c0_11, %c0_12] : memref<8x1xf32, #tpu.memory_space<vmem>>, vector<8x1xf32>
      %cst_13 = arith.constant dense<0xFF800000> : vector<8xf32>
      %26 = vector.multi_reduction <maximumf>, %24, %cst_13 [1] : vector<8x8xf32> to vector<8xf32>
      %27 = vector.shape_cast %26 : vector<8xf32> to vector<8x1xf32>
      %28 = arith.maximumf %25, %27 : vector<8x1xf32>
      %29 = arith.subf %25, %28 : vector<8x1xf32>
      %30 = math.exp %29 : vector<8x1xf32>
      %31 = vector.broadcast %28 : vector<8x1xf32> to vector<8x8xf32>
      %32 = arith.subf %24, %31 : vector<8x8xf32>
      %33 = math.exp %32 : vector<8x8xf32>
      %c0_14 = arith.constant 0 : index
      %c0_15 = arith.constant 0 : index
      %34 = vector.load %arg8[%c0_14, %c0_15] : memref<8x1xf32, #tpu.memory_space<vmem>>, vector<8x1xf32>
      %35 = arith.mulf %30, %34 : vector<8x1xf32>
      %cst_16 = arith.constant dense<0.000000e+00> : vector<8xf32>
      %36 = vector.multi_reduction <add>, %33, %cst_16 [1] : vector<8x8xf32> to vector<8xf32>
      %37 = vector.shape_cast %36 : vector<8xf32> to vector<8x1xf32>
      %38 = arith.addf %35, %37 : vector<8x1xf32>
      %c0_17 = arith.constant 0 : index
      %c0_18 = arith.constant 0 : index
      %39 = vector.load %arg8[%c0_17, %c0_18] : memref<8x1xf32, #tpu.memory_space<vmem>>, vector<8x1xf32>
      tpu.vector_store %arg8[%c0_17, %c0_18], %38 {strides = array<i32>} : memref<8x1xf32, #tpu.memory_space<vmem>>, vector<8x1xf32>,
      %c0_19 = arith.constant 0 : index
      %c0_20 = arith.constant 0 : index
      %40 = vector.load %arg9[%c0_19, %c0_20] : memref<8x8xf32, #tpu.memory_space<vmem>>, vector<8x8xf32>
      %41 = vector.broadcast %30 : vector<8x1xf32> to vector<8x8xf32>
      %42 = arith.mulf %41, %40 : vector<8x8xf32>
      %43 = arith.truncf %33 : vector<8x8xf32> to vector<8x8xbf16>
      %c0_21 = arith.constant 0 : index
      %c0_22 = arith.constant 0 : index
      %c0_23 = arith.constant 0 : index
      %44 = vector.load %arg5[%c0_21, %c0_22, %c0_23] : memref<1x8x8xbf16, #tpu.memory_space<vmem>>, vector<1x8x8xbf16>
      %45 = vector.shape_cast %44 : vector<1x8x8xbf16> to vector<8x8xbf16>
      %cst_24 = arith.constant dense<0.000000e+00> : vector<8x8xf32>
      %46 = tpu.matmul %43, %45, %cst_24 {dimension_numbers = #tpu.dot_dimension_numbers<[1], [0], [0], [1], [0, 0, 1, 1], [], []>} : vector<8x8xbf16>, vector<8x8xbf16>, vector<8x8xf32> -> vector<8x8xf32>
      %47 = arith.addf %42, %46 : vector<8x8xf32>
      %c0_25 = arith.constant 0 : index
      %c0_26 = arith.constant 0 : index
      %48 = vector.load %arg9[%c0_25, %c0_26] : memref<8x8xf32, #tpu.memory_space<vmem>>, vector<8x8xf32>
      tpu.vector_store %arg9[%c0_25, %c0_26], %47 {strides = array<i32>} : memref<8x8xf32, #tpu.memory_space<vmem>>, vector<8x8xf32>,
      %c0_27 = arith.constant 0 : index
      %c0_28 = arith.constant 0 : index
      %49 = vector.load %arg7[%c0_27, %c0_28] : memref<8x1xf32, #tpu.memory_space<vmem>>, vector<8x1xf32>
      tpu.vector_store %arg7[%c0_27, %c0_28], %28 {strides = array<i32>} : memref<8x1xf32, #tpu.memory_space<vmem>>, vector<8x1xf32>,
    } else {
    }
    %c0_i32_2 = arith.constant 0 : i32
    %6 = arith.cmpi eq, %arg2, %c0_i32_2 : i32
    %7 = arith.extui %6 : i1 to i32
    %c0_i32_3 = arith.constant 0 : i32
    %8 = arith.cmpi ne, %7, %c0_i32_3 : i32
    scf.if %8 {
      %c0 = arith.constant 0 : index
      %c0_4 = arith.constant 0 : index
      %9 = vector.load %arg9[%c0, %c0_4] : memref<8x8xf32, #tpu.memory_space<vmem>>, vector<8x8xf32>
      %c0_5 = arith.constant 0 : index
      %c0_6 = arith.constant 0 : index
      %10 = vector.load %arg8[%c0_5, %c0_6] : memref<8x1xf32, #tpu.memory_space<vmem>>, vector<8x1xf32>
      %11 = tpu.reciprocal %10 {approx = true} : vector<8x1xf32> -> vector<8x1xf32>
      %12 = vector.broadcast %11 : vector<8x1xf32> to vector<8x8xf32>
      %13 = arith.mulf %9, %12 : vector<8x8xf32>
      %14 = arith.truncf %13 : vector<8x8xf32> to vector<8x8xbf16>
      %c0_7 = arith.constant 0 : index
      %c0_8 = arith.constant 0 : index
      %c0_9 = arith.constant 0 : index
      %15 = vector.load %arg6[%c0_7, %c0_8, %c0_9] : memref<1x8x8xbf16, #tpu.memory_space<vmem>>, vector<1x8x8xbf16>
      %16 = vector.shape_cast %15 : vector<1x8x8xbf16> to vector<8x8xbf16>
      %17 = vector.shape_cast %14 : vector<8x8xbf16> to vector<1x8x8xbf16>
      tpu.vector_store %arg6[%c0_7, %c0_8, %c0_9], %17 {strides = array<i32>} : memref<1x8x8xbf16, #tpu.memory_space<vmem>>, vector<1x8x8xbf16>,
    } else {
    }
    return
  }
  func.func @transform_0(%arg0: i32, %arg1: i32, %arg2: i32) -> (i32, i32, i32) {
    %c0_i32 = arith.constant 0 : i32
    %c0_i32_0 = arith.constant 0 : i32
    return %arg0, %arg1, %c0_i32 : i32, i32, i32
  }
  func.func @transform_1(%arg0: i32, %arg1: i32, %arg2: i32) -> (i32, i32, i32) {
    %0 = arith.minsi %arg2, %arg1 : i32
    %c0_i32 = arith.constant 0 : i32
    %c0_i32_0 = arith.constant 0 : i32
    return %arg0, %0, %c0_i32 : i32, i32, i32
  }
  func.func @transform_2(%arg0: i32, %arg1: i32, %arg2: i32) -> (i32, i32, i32) {
    %0 = arith.minsi %arg2, %arg1 : i32
    %c0_i32 = arith.constant 0 : i32
    %c0_i32_0 = arith.constant 0 : i32
    return %arg0, %0, %c0_i32 : i32, i32, i32
  }
  func.func @transform_3(%arg0: i32, %arg1: i32, %arg2: i32) -> (i32, i32, i32) {
    %c0_i32 = arith.constant 0 : i32
    %c0_i32_0 = arith.constant 0 : i32
    return %arg0, %arg1, %c0_i32 : i32, i32, i32
  }
}

module attributes {stable_mosaic.version = 11 : i64} {
  func.func @_matmul_res_kernel(%arg0: i32, %arg1: i32, %arg2: i32, %arg3: memref<16x32xbf16, #tpu.memory_space<vmem>>, %arg4: memref<32x32xbf16, #tpu.memory_space<vmem>>, %arg5: memref<16x32xbf16, #tpu.memory_space<vmem>>, %arg6: memref<16x32xbf16, #tpu.memory_space<vmem>>, %arg7: memref<16x32xf32, #tpu.memory_space<vmem>>) attributes {dimension_semantics = [#tpu.dimension_semantics<parallel>, #tpu.dimension_semantics<parallel>, #tpu.dimension_semantics<arbitrary>], iteration_bounds = array<i64: 1, 1, 1>, scalar_prefetch = 0 : i64, scratch_operands = 1 : i64, tpu.core_type = #tpu.core_type<tc>, window_params = [{transform_indices = @transform_0, window_bounds = array<i64: 16, 32>}, {transform_indices = @transform_1, window_bounds = array<i64: 32, 32>}, {transform_indices = @transform_2, window_bounds = array<i64: 16, 32>}, {transform_indices = @transform_3, window_bounds = array<i64: 16, 32>}]} {
    %c0_i32 = arith.constant 0 : i32
    %0 = arith.cmpi eq, %arg2, %c0_i32 : i32
    %1 = arith.extui %0 : i1 to i32
    %c0_i32_0 = arith.constant 0 : i32
    %2 = arith.cmpi ne, %1, %c0_i32_0 : i32
    scf.if %2 {
      %cst_10 = arith.constant 0.000000e+00 : f32
      %12 = vector.broadcast %cst_10 : f32 to vector<16x32xf32>
      %c0_11 = arith.constant 0 : index
      %c0_12 = arith.constant 0 : index
      %13 = vector.load %arg7[%c0_11, %c0_12] : memref<16x32xf32, #tpu.memory_space<vmem>>, vector<16x32xf32>
      tpu.vector_store %arg7[%c0_11, %c0_12], %12 {strides = array<i32>} : memref<16x32xf32, #tpu.memory_space<vmem>>, vector<16x32xf32>,
    } else {
    }
    %c0 = arith.constant 0 : index
    %c0_1 = arith.constant 0 : index
    %3 = vector.load %arg7[%c0, %c0_1] : memref<16x32xf32, #tpu.memory_space<vmem>>, vector<16x32xf32>
    %c0_2 = arith.constant 0 : index
    %c0_3 = arith.constant 0 : index
    %4 = vector.load %arg3[%c0_2, %c0_3] : memref<16x32xbf16, #tpu.memory_space<vmem>>, vector<16x32xbf16>
    %c0_4 = arith.constant 0 : index
    %c0_5 = arith.constant 0 : index
    %5 = vector.load %arg4[%c0_4, %c0_5] : memref<32x32xbf16, #tpu.memory_space<vmem>>, vector<32x32xbf16>
    %cst = arith.constant dense<0.000000e+00> : vector<16x32xf32>
    %6 = tpu.matmul %4, %5, %cst {dimension_numbers = #tpu.dot_dimension_numbers<[1], [0], [0], [1], [0, 0, 1, 1], [], []>} : vector<16x32xbf16>, vector<32x32xbf16>, vector<16x32xf32> -> vector<16x32xf32>
    %7 = arith.addf %3, %6 : vector<16x32xf32>
    %c0_6 = arith.constant 0 : index
    %c0_7 = arith.constant 0 : index
    %8 = vector.load %arg7[%c0_6, %c0_7] : memref<16x32xf32, #tpu.memory_space<vmem>>, vector<16x32xf32>
    tpu.vector_store %arg7[%c0_6, %c0_7], %7 {strides = array<i32>} : memref<16x32xf32, #tpu.memory_space<vmem>>, vector<16x32xf32>,
    %c0_i32_8 = arith.constant 0 : i32
    %9 = arith.cmpi eq, %arg2, %c0_i32_8 : i32
    %10 = arith.extui %9 : i1 to i32
    %c0_i32_9 = arith.constant 0 : i32
    %11 = arith.cmpi ne, %10, %c0_i32_9 : i32
    scf.if %11 {
      %c0_10 = arith.constant 0 : index
      %c0_11 = arith.constant 0 : index
      %12 = vector.load %arg7[%c0_10, %c0_11] : memref<16x32xf32, #tpu.memory_space<vmem>>, vector<16x32xf32>
      %c0_12 = arith.constant 0 : index
      %c0_13 = arith.constant 0 : index
      %13 = vector.load %arg5[%c0_12, %c0_13] : memref<16x32xbf16, #tpu.memory_space<vmem>>, vector<16x32xbf16>
      %14 = arith.extf %13 : vector<16x32xbf16> to vector<16x32xf32>
      %15 = arith.addf %12, %14 : vector<16x32xf32>
      %16 = arith.truncf %15 : vector<16x32xf32> to vector<16x32xbf16>
      %c0_14 = arith.constant 0 : index
      %c0_15 = arith.constant 0 : index
      %17 = vector.load %arg6[%c0_14, %c0_15] : memref<16x32xbf16, #tpu.memory_space<vmem>>, vector<16x32xbf16>
      tpu.vector_store %arg6[%c0_14, %c0_15], %16 {strides = array<i32>} : memref<16x32xbf16, #tpu.memory_space<vmem>>, vector<16x32xbf16>,
    } else {
    }
    return
  }
  func.func @transform_0(%arg0: i32, %arg1: i32, %arg2: i32) -> (i32, i32) {
    %c0_i32 = arith.constant 0 : i32
    return %arg0, %arg2 : i32, i32
  }
  func.func @transform_1(%arg0: i32, %arg1: i32, %arg2: i32) -> (i32, i32) {
    %c0_i32 = arith.constant 0 : i32
    return %arg2, %arg1 : i32, i32
  }
  func.func @transform_2(%arg0: i32, %arg1: i32, %arg2: i32) -> (i32, i32) {
    %c0_i32 = arith.constant 0 : i32
    return %arg0, %arg1 : i32, i32
  }
  func.func @transform_3(%arg0: i32, %arg1: i32, %arg2: i32) -> (i32, i32) {
    %c0_i32 = arith.constant 0 : i32
    return %arg0, %arg1 : i32, i32
  }
}

module attributes {stable_mosaic.version = 11 : i64} {
  func.func @_ffn_kernel(%arg0: i32, %arg1: i32, %arg2: memref<16x32xbf16, #tpu.memory_space<vmem>>, %arg3: memref<1x32xf32, #tpu.memory_space<vmem>>, %arg4: memref<32x64xbf16, #tpu.memory_space<vmem>>, %arg5: memref<32x64xbf16, #tpu.memory_space<vmem>>, %arg6: memref<64x32xbf16, #tpu.memory_space<vmem>>, %arg7: memref<16x32xbf16, #tpu.memory_space<vmem>>, %arg8: memref<16x32xbf16, #tpu.memory_space<vmem>>, %arg9: memref<16x32xf32, #tpu.memory_space<vmem>>) attributes {dimension_semantics = [#tpu.dimension_semantics<parallel>, #tpu.dimension_semantics<arbitrary>], iteration_bounds = array<i64: 1, 1>, scalar_prefetch = 0 : i64, scratch_operands = 2 : i64, tpu.core_type = #tpu.core_type<tc>, window_params = [{transform_indices = @transform_0, window_bounds = array<i64: 16, 32>}, {pipeline_mode = #tpu.pipeline_mode<synchronous>, transform_indices = @transform_1, window_bounds = array<i64: 1, 32>}, {transform_indices = @transform_2, window_bounds = array<i64: 32, 64>}, {transform_indices = @transform_3, window_bounds = array<i64: 32, 64>}, {transform_indices = @transform_4, window_bounds = array<i64: 64, 32>}, {transform_indices = @transform_5, window_bounds = array<i64: 16, 32>}]} {
    %c0_i32 = arith.constant 0 : i32
    %0 = arith.cmpi eq, %arg1, %c0_i32 : i32
    %1 = arith.extui %0 : i1 to i32
    %c0_i32_0 = arith.constant 0 : i32
    %2 = arith.cmpi ne, %1, %c0_i32_0 : i32
    scf.if %2 {
      %c0_17 = arith.constant 0 : index
      %c0_18 = arith.constant 0 : index
      %24 = vector.load %arg2[%c0_17, %c0_18] : memref<16x32xbf16, #tpu.memory_space<vmem>>, vector<16x32xbf16>
      %25 = arith.extf %24 : vector<16x32xbf16> to vector<16x32xf32>
      %26 = arith.mulf %25, %25 : vector<16x32xf32>
      %cst_19 = arith.constant dense<0.000000e+00> : vector<16xf32>
      %27 = vector.multi_reduction <add>, %26, %cst_19 [1] : vector<16x32xf32> to vector<16xf32>
      %28 = vector.shape_cast %27 : vector<16xf32> to vector<16x1xf32>
      %cst_20 = arith.constant 3.200000e+01 : f32
      %29 = vector.broadcast %cst_20 : f32 to vector<16x1xf32>
      %30 = arith.divf %28, %29 : vector<16x1xf32>
      %cst_21 = arith.constant 9.99999974E-6 : f32
      %31 = vector.broadcast %cst_21 : f32 to vector<16x1xf32>
      %32 = arith.addf %30, %31 : vector<16x1xf32>
      %33 = math.rsqrt %32 : vector<16x1xf32>
      %34 = vector.broadcast %33 : vector<16x1xf32> to vector<16x32xf32>
      %35 = arith.mulf %25, %34 : vector<16x32xf32>
      %c0_22 = arith.constant 0 : index
      %c0_23 = arith.constant 0 : index
      %36 = vector.load %arg3[%c0_22, %c0_23] : memref<1x32xf32, #tpu.memory_space<vmem>>, vector<1x32xf32>
      %37 = vector.broadcast %36 : vector<1x32xf32> to vector<16x32xf32>
      %38 = arith.mulf %35, %37 : vector<16x32xf32>
      %39 = arith.truncf %38 : vector<16x32xf32> to vector<16x32xbf16>
      %c0_24 = arith.constant 0 : index
      %c0_25 = arith.constant 0 : index
      %40 = vector.load %arg8[%c0_24, %c0_25] : memref<16x32xbf16, #tpu.memory_space<vmem>>, vector<16x32xbf16>
      tpu.vector_store %arg8[%c0_24, %c0_25], %39 {strides = array<i32>} : memref<16x32xbf16, #tpu.memory_space<vmem>>, vector<16x32xbf16>,
      %cst_26 = arith.constant 0.000000e+00 : f32
      %41 = vector.broadcast %cst_26 : f32 to vector<16x32xf32>
      %c0_27 = arith.constant 0 : index
      %c0_28 = arith.constant 0 : index
      %42 = vector.load %arg9[%c0_27, %c0_28] : memref<16x32xf32, #tpu.memory_space<vmem>>, vector<16x32xf32>
      tpu.vector_store %arg9[%c0_27, %c0_28], %41 {strides = array<i32>} : memref<16x32xf32, #tpu.memory_space<vmem>>, vector<16x32xf32>,
    } else {
    }
    %c0 = arith.constant 0 : index
    %c0_1 = arith.constant 0 : index
    %3 = vector.load %arg8[%c0, %c0_1] : memref<16x32xbf16, #tpu.memory_space<vmem>>, vector<16x32xbf16>
    %c0_2 = arith.constant 0 : index
    %c0_3 = arith.constant 0 : index
    %4 = vector.load %arg4[%c0_2, %c0_3] : memref<32x64xbf16, #tpu.memory_space<vmem>>, vector<32x64xbf16>
    %cst = arith.constant dense<0.000000e+00> : vector<16x64xf32>
    %5 = tpu.matmul %3, %4, %cst {dimension_numbers = #tpu.dot_dimension_numbers<[1], [0], [0], [1], [0, 0, 1, 1], [], []>} : vector<16x32xbf16>, vector<32x64xbf16>, vector<16x64xf32> -> vector<16x64xf32>
    %c0_4 = arith.constant 0 : index
    %c0_5 = arith.constant 0 : index
    %6 = vector.load %arg5[%c0_4, %c0_5] : memref<32x64xbf16, #tpu.memory_space<vmem>>, vector<32x64xbf16>
    %cst_6 = arith.constant dense<0.000000e+00> : vector<16x64xf32>
    %7 = tpu.matmul %3, %6, %cst_6 {dimension_numbers = #tpu.dot_dimension_numbers<[1], [0], [0], [1], [0, 0, 1, 1], [], []>} : vector<16x32xbf16>, vector<32x64xbf16>, vector<16x64xf32> -> vector<16x64xf32>
    %8 = arith.negf %5 : vector<16x64xf32>
    %9 = math.exp %8 : vector<16x64xf32>
    %cst_7 = arith.constant 1.000000e+00 : f32
    %10 = vector.broadcast %cst_7 : f32 to vector<16x64xf32>
    %11 = arith.addf %10, %9 : vector<16x64xf32>
    %12 = arith.divf %10, %11 : vector<16x64xf32>
    %13 = arith.mulf %5, %12 : vector<16x64xf32>
    %14 = arith.mulf %13, %7 : vector<16x64xf32>
    %15 = arith.truncf %14 : vector<16x64xf32> to vector<16x64xbf16>
    %c0_8 = arith.constant 0 : index
    %c0_9 = arith.constant 0 : index
    %16 = vector.load %arg9[%c0_8, %c0_9] : memref<16x32xf32, #tpu.memory_space<vmem>>, vector<16x32xf32>
    %c0_10 = arith.constant 0 : index
    %c0_11 = arith.constant 0 : index
    %17 = vector.load %arg6[%c0_10, %c0_11] : memref<64x32xbf16, #tpu.memory_space<vmem>>, vector<64x32xbf16>
    %cst_12 = arith.constant dense<0.000000e+00> : vector<16x32xf32>
    %18 = tpu.matmul %15, %17, %cst_12 {dimension_numbers = #tpu.dot_dimension_numbers<[1], [0], [0], [1], [0, 0, 1, 1], [], []>} : vector<16x64xbf16>, vector<64x32xbf16>, vector<16x32xf32> -> vector<16x32xf32>
    %19 = arith.addf %16, %18 : vector<16x32xf32>
    %c0_13 = arith.constant 0 : index
    %c0_14 = arith.constant 0 : index
    %20 = vector.load %arg9[%c0_13, %c0_14] : memref<16x32xf32, #tpu.memory_space<vmem>>, vector<16x32xf32>
    tpu.vector_store %arg9[%c0_13, %c0_14], %19 {strides = array<i32>} : memref<16x32xf32, #tpu.memory_space<vmem>>, vector<16x32xf32>,
    %c0_i32_15 = arith.constant 0 : i32
    %21 = arith.cmpi eq, %arg1, %c0_i32_15 : i32
    %22 = arith.extui %21 : i1 to i32
    %c0_i32_16 = arith.constant 0 : i32
    %23 = arith.cmpi ne, %22, %c0_i32_16 : i32
    scf.if %23 {
      %c0_17 = arith.constant 0 : index
      %c0_18 = arith.constant 0 : index
      %24 = vector.load %arg9[%c0_17, %c0_18] : memref<16x32xf32, #tpu.memory_space<vmem>>, vector<16x32xf32>
      %c0_19 = arith.constant 0 : index
      %c0_20 = arith.constant 0 : index
      %25 = vector.load %arg2[%c0_19, %c0_20] : memref<16x32xbf16, #tpu.memory_space<vmem>>, vector<16x32xbf16>
      %26 = arith.extf %25 : vector<16x32xbf16> to vector<16x32xf32>
      %27 = arith.addf %24, %26 : vector<16x32xf32>
      %28 = arith.truncf %27 : vector<16x32xf32> to vector<16x32xbf16>
      %c0_21 = arith.constant 0 : index
      %c0_22 = arith.constant 0 : index
      %29 = vector.load %arg7[%c0_21, %c0_22] : memref<16x32xbf16, #tpu.memory_space<vmem>>, vector<16x32xbf16>
      tpu.vector_store %arg7[%c0_21, %c0_22], %28 {strides = array<i32>} : memref<16x32xbf16, #tpu.memory_space<vmem>>, vector<16x32xbf16>,
    } else {
    }
    return
  }
  func.func @transform_0(%arg0: i32, %arg1: i32) -> (i32, i32) {
    %c0_i32 = arith.constant 0 : i32
    %c0_i32_0 = arith.constant 0 : i32
    return %arg0, %c0_i32 : i32, i32
  }
  func.func @transform_1(%arg0: i32, %arg1: i32) -> (i32, i32) {
    %c0_i32 = arith.constant 0 : i32
    %c0_i32_0 = arith.constant 0 : i32
    %c0_i32_1 = arith.constant 0 : i32
    return %c0_i32, %c0_i32_0 : i32, i32
  }
  func.func @transform_2(%arg0: i32, %arg1: i32) -> (i32, i32) {
    %c0_i32 = arith.constant 0 : i32
    %c0_i32_0 = arith.constant 0 : i32
    return %c0_i32, %arg1 : i32, i32
  }
  func.func @transform_3(%arg0: i32, %arg1: i32) -> (i32, i32) {
    %c0_i32 = arith.constant 0 : i32
    %c0_i32_0 = arith.constant 0 : i32
    return %c0_i32, %arg1 : i32, i32
  }
  func.func @transform_4(%arg0: i32, %arg1: i32) -> (i32, i32) {
    %c0_i32 = arith.constant 0 : i32
    %c0_i32_0 = arith.constant 0 : i32
    return %arg1, %c0_i32 : i32, i32
  }
  func.func @transform_5(%arg0: i32, %arg1: i32) -> (i32, i32) {
    %c0_i32 = arith.constant 0 : i32
    %c0_i32_0 = arith.constant 0 : i32
    return %arg0, %c0_i32 : i32, i32
  }
}

module attributes {stable_mosaic.version = 11 : i64} {
  func.func @_rms_matmul_kernel(%arg0: i32, %arg1: i32, %arg2: memref<16x32xbf16, #tpu.memory_space<vmem>>, %arg3: memref<1x32xf32, #tpu.memory_space<vmem>>, %arg4: memref<32x64xbf16, #tpu.memory_space<vmem>>, %arg5: memref<16x64xf32, #tpu.memory_space<vmem>>, %arg6: memref<16x32xbf16, #tpu.memory_space<vmem>>) attributes {dimension_semantics = [#tpu.dimension_semantics<parallel>, #tpu.dimension_semantics<arbitrary>], iteration_bounds = array<i64: 1, 1>, scalar_prefetch = 0 : i64, scratch_operands = 1 : i64, tpu.core_type = #tpu.core_type<tc>, window_params = [{transform_indices = @transform_0, window_bounds = array<i64: 16, 32>}, {pipeline_mode = #tpu.pipeline_mode<synchronous>, transform_indices = @transform_1, window_bounds = array<i64: 1, 32>}, {transform_indices = @transform_2, window_bounds = array<i64: 32, 64>}, {transform_indices = @transform_3, window_bounds = array<i64: 16, 64>}]} {
    %c0_i32 = arith.constant 0 : i32
    %0 = arith.cmpi eq, %arg1, %c0_i32 : i32
    %1 = arith.extui %0 : i1 to i32
    %c0_i32_0 = arith.constant 0 : i32
    %2 = arith.cmpi ne, %1, %c0_i32_0 : i32
    scf.if %2 {
      %c0_6 = arith.constant 0 : index
      %c0_7 = arith.constant 0 : index
      %7 = vector.load %arg2[%c0_6, %c0_7] : memref<16x32xbf16, #tpu.memory_space<vmem>>, vector<16x32xbf16>
      %8 = arith.extf %7 : vector<16x32xbf16> to vector<16x32xf32>
      %9 = arith.mulf %8, %8 : vector<16x32xf32>
      %cst_8 = arith.constant dense<0.000000e+00> : vector<16xf32>
      %10 = vector.multi_reduction <add>, %9, %cst_8 [1] : vector<16x32xf32> to vector<16xf32>
      %11 = vector.shape_cast %10 : vector<16xf32> to vector<16x1xf32>
      %cst_9 = arith.constant 3.200000e+01 : f32
      %12 = vector.broadcast %cst_9 : f32 to vector<16x1xf32>
      %13 = arith.divf %11, %12 : vector<16x1xf32>
      %cst_10 = arith.constant 9.99999974E-6 : f32
      %14 = vector.broadcast %cst_10 : f32 to vector<16x1xf32>
      %15 = arith.addf %13, %14 : vector<16x1xf32>
      %16 = math.rsqrt %15 : vector<16x1xf32>
      %17 = vector.broadcast %16 : vector<16x1xf32> to vector<16x32xf32>
      %18 = arith.mulf %8, %17 : vector<16x32xf32>
      %c0_11 = arith.constant 0 : index
      %c0_12 = arith.constant 0 : index
      %19 = vector.load %arg3[%c0_11, %c0_12] : memref<1x32xf32, #tpu.memory_space<vmem>>, vector<1x32xf32>
      %20 = vector.broadcast %19 : vector<1x32xf32> to vector<16x32xf32>
      %21 = arith.mulf %18, %20 : vector<16x32xf32>
      %22 = arith.truncf %21 : vector<16x32xf32> to vector<16x32xbf16>
      %c0_13 = arith.constant 0 : index
      %c0_14 = arith.constant 0 : index
      %23 = vector.load %arg6[%c0_13, %c0_14] : memref<16x32xbf16, #tpu.memory_space<vmem>>, vector<16x32xbf16>
      tpu.vector_store %arg6[%c0_13, %c0_14], %22 {strides = array<i32>} : memref<16x32xbf16, #tpu.memory_space<vmem>>, vector<16x32xbf16>,
    } else {
    }
    %c0 = arith.constant 0 : index
    %c0_1 = arith.constant 0 : index
    %3 = vector.load %arg6[%c0, %c0_1] : memref<16x32xbf16, #tpu.memory_space<vmem>>, vector<16x32xbf16>
    %c0_2 = arith.constant 0 : index
    %c0_3 = arith.constant 0 : index
    %4 = vector.load %arg4[%c0_2, %c0_3] : memref<32x64xbf16, #tpu.memory_space<vmem>>, vector<32x64xbf16>
    %cst = arith.constant dense<0.000000e+00> : vector<16x64xf32>
    %5 = tpu.matmul %3, %4, %cst {dimension_numbers = #tpu.dot_dimension_numbers<[1], [0], [0], [1], [0, 0, 1, 1], [], []>} : vector<16x32xbf16>, vector<32x64xbf16>, vector<16x64xf32> -> vector<16x64xf32>
    %c0_4 = arith.constant 0 : index
    %c0_5 = arith.constant 0 : index
    %6 = vector.load %arg5[%c0_4, %c0_5] : memref<16x64xf32, #tpu.memory_space<vmem>>, vector<16x64xf32>
    tpu.vector_store %arg5[%c0_4, %c0_5], %5 {strides = array<i32>} : memref<16x64xf32, #tpu.memory_space<vmem>>, vector<16x64xf32>,
    return
  }
  func.func @transform_0(%arg0: i32, %arg1: i32) -> (i32, i32) {
    %c0_i32 = arith.constant 0 : i32
    %c0_i32_0 = arith.constant 0 : i32
    return %arg0, %c0_i32 : i32, i32
  }
  func.func @transform_1(%arg0: i32, %arg1: i32) -> (i32, i32) {
    %c0_i32 = arith.constant 0 : i32
    %c0_i32_0 = arith.constant 0 : i32
    %c0_i32_1 = arith.constant 0 : i32
    return %c0_i32, %c0_i32_0 : i32, i32
  }
  func.func @transform_2(%arg0: i32, %arg1: i32) -> (i32, i32) {
    %c0_i32 = arith.constant 0 : i32
    %c0_i32_0 = arith.constant 0 : i32
    return %c0_i32, %arg1 : i32, i32
  }
  func.func @transform_3(%arg0: i32, %arg1: i32) -> (i32, i32) {
    %c0_i32 = arith.constant 0 : i32
    return %arg0, %arg1 : i32, i32
  }
}

</mosaic_0001>

<llo_original>
// kernel: transformer_lm_forward.12
$region0: #{transformer_lm_forward.12}
  #allocation0 [shape = 'u32[]', space=smem, size = 0x4, offset = 0x4, fixed_abs, tag = 'smem constant byte address 0x4 - core index']
  #allocation1 [shape = 'u32[144,128]{1,0:T(1,128)}', space=vmem, size = 0x12000, scoped, tag = 'internal scratch']
  %s0 = inlined_call_operand.vmem [shape: bf16[8,8,8], index: 0, kind: input, shape index: {}]
  %s1 = inlined_call_operand.vmem [shape: bf16[8,8,8], index: 1, kind: input, shape index: {}]
  %s2 = inlined_call_operand.vmem [shape: f32[8,4], index: 2, kind: input, shape index: {}]
  %s3 = inlined_call_operand.vmem [shape: f32[8,4], index: 3, kind: input, shape index: {}]
  %s4 = inlined_call_operand.vmem [shape: bf16[8,8,8], index: 4, kind: output, shape index: {0}]
  %s5 = inlined_call_operand.vmem [shape: bf16[8,8,8], index: 5, kind: output, shape index: {1}]
  %6 = xla_tuple %s4, %s5
  %s7 = sld [smem:[#allocation0]]
  $region57: #{transformer_lm_forward.12} parent=0
    _
  %s9 = ssub.s32 1, %s7
  %s10 = scalar_select 0, %s9, %s7
  loop: start=0, step=1, limit=10
  $region2: #{transformer_lm_forward.12} parent=0 // loop_pre_header
    _
  $region3: #{transformer_lm_forward.12} parent=0 // loop_header
    %s12 = sphi 0, %s16
    %p13 = scmp.ge.s32.totalorder %s12, 10
    %s19 = sphi 0, %s31
    %s20 = sphi 0, %s27
    %s21 = sphi 0, %s19
    %s22 = sphi 0, %s20
    %s23 = sphi 0, %s21
    %s24 = sphi 0, %s22
    %s36 = sphi 0, %s38
    %s39 = sphi 0, %s36
    %s40 = sphi 0, %s39
    %s56 = sphi 0, %s40
    %s64 = sphi 0, %s66
    %s67 = sphi 0, %s64
    %s68 = sphi 0, %s67
    %s84 = sphi 0, %s68
    %s90 = sphi 0, %s92
    %s93 = sphi 0, %s90
    %s94 = sphi 0, %s93
    %s110 = sphi 0, %s94
    %s116 = sphi 0, %s118
    %s119 = sphi 0, %s116
    %s120 = sphi 0, %s119
    %s136 = sphi 0, %s120
    %s144 = sphi 0, %s146
    %s147 = sphi 0, %s144
    %s148 = sphi 0, %s147
    %s164 = sphi 0, %s148
    %s172 = sphi 0, %s174
    %s175 = sphi 0, %s172
    %s176 = sphi 0, %s175
    %s192 = sphi 0, %s176
  $region4: #{transformer_lm_forward.12} parent=0 // loop_header_branch
    %15 = sbr.rel (%p13) target = $region8
  $region5: #{transformer_lm_forward.12} parent=0 // loop_body
    %s17 = ssub.s32 %s12, 1
    %s18 = ssub.s32 %s12, 2
    %s25 = sadd.s32 1, %s20
    %p26 = scmp.ge.s32.totalorder %s25, 1
    %s27 = scalar_select %p26, 0, %s25
    %s28 = sadd.s32 1, %s19
    %s29 = scalar_select %p26, %s28, %s19
    %p30 = scmp.ge.s32.totalorder %s29, 8
    %s31 = scalar_select %p30, 0, %s29
    %s32 = ssub.s32 %s19, %s31
    %s33 = ssub.s32 %s20, %s27
    %s34 = sor.u32 %s32, %s33
    %p35 = scmp.eq.s32.totalorder %s34, 0
    %s37 = sadd.s32 %s36, 1
    %s38 = scalar_select %p35, %s36, %s37
    %p41 = pneg %p35
    %p42 = scmp.eq.s32.totalorder %s12, 7
    %p43 = por %p41, %p42
    %p44 = scmp.ne.s32.totalorder %s36, %s39
    %p45 = scmp.eq.s32.totalorder %s12, 0
    %p46 = por %p44, %p45
    %p47 = scmp.ne.s32.totalorder %s36, %s39
    %p48 = scmp.eq.s32.totalorder %s17, 7
    %p49 = por %p47, %p48
    %p50 = scmp.ne.s32.totalorder %s39, %s40
    %p51 = scmp.eq.s32.totalorder %s17, 0
    %p52 = por %p50, %p51
    %p53 = scmp.ne.s32.totalorder %s39, %s40
    %p54 = scmp.eq.s32.totalorder %s18, 7
    %p55 = por %p53, %p54
    %p57 = scmp.ne.s32.totalorder %s40, %s56
    %p58 = scmp.eq.s32.totalorder %s18, 0
    %p59 = por %p57, %p58
    %s60 = ssub.s32 %s19, %s31
    %s61 = ssub.s32 %s20, %s27
    %s62 = sor.u32 %s60, %s61
    %p63 = scmp.eq.s32.totalorder %s62, 0
    %s65 = sadd.s32 %s64, 1
    %s66 = scalar_select %p63, %s64, %s65
    %p69 = pneg %p63
    %p70 = scmp.eq.s32.totalorder %s12, 7
    %p71 = por %p69, %p70
    %p72 = scmp.ne.s32.totalorder %s64, %s67
    %p73 = scmp.eq.s32.totalorder %s12, 0
    %p74 = por %p72, %p73
    %p75 = scmp.ne.s32.totalorder %s64, %s67
    %p76 = scmp.eq.s32.totalorder %s17, 7
    %p77 = por %p75, %p76
    %p78 = scmp.ne.s32.totalorder %s67, %s68
    %p79 = scmp.eq.s32.totalorder %s17, 0
    %p80 = por %p78, %p79
    %p81 = scmp.ne.s32.totalorder %s67, %s68
    %p82 = scmp.eq.s32.totalorder %s18, 7
    %p83 = por %p81, %p82
    %p85 = scmp.ne.s32.totalorder %s68, %s84
    %p86 = scmp.eq.s32.totalorder %s18, 0
    %p87 = por %p85, %p86
    %s88 = ssub.s32 %s20, %s27
    %p89 = scmp.eq.s32.totalorder %s88, 0
    %s91 = sadd.s32 %s90, 1
    %s92 = scalar_select %p89, %s90, %s91
    %p95 = pneg %p89
    %p96 = scmp.eq.s32.totalorder %s12, 7
    %p97 = por %p95, %p96
    %p98 = scmp.ne.s32.totalorder %s90, %s93
    %p99 = scmp.eq.s32.totalorder %s12, 0
    %p100 = por %p98, %p99
    %p101 = scmp.ne.s32.totalorder %s90, %s93
    %p102 = scmp.eq.s32.totalorder %s17, 7
    %p103 = por %p101, %p102
    %p104 = scmp.ne.s32.totalorder %s93, %s94
    %p105 = scmp.eq.s32.totalorder %s17, 0
    %p106 = por %p104, %p105
    %p107 = scmp.ne.s32.totalorder %s93, %s94
    %p108 = scmp.eq.s32.totalorder %s18, 7
    %p109 = por %p107, %p108
    %p111 = scmp.ne.s32.totalorder %s94, %s110
    %p112 = scmp.eq.s32.totalorder %s18, 0
    %p113 = por %p111, %p112
    %s114 = ssub.s32 %s20, %s27
    %p115 = scmp.eq.s32.totalorder %s114, 0
    %s117 = sadd.s32 %s116, 1
    %s118 = scalar_select %p115, %s116, %s117
    %p121 = pneg %p115
    %p122 = scmp.eq.s32.totalorder %s12, 7
    %p123 = por %p121, %p122
    %p124 = scmp.ne.s32.totalorder %s116, %s119
    %p125 = scmp.eq.s32.totalorder %s12, 0
    %p126 = por %p124, %p125
    %p127 = scmp.ne.s32.totalorder %s116, %s119
    %p128 = scmp.eq.s32.totalorder %s17, 7
    %p129 = por %p127, %p128
    %p130 = scmp.ne.s32.totalorder %s119, %s120
    %p131 = scmp.eq.s32.totalorder %s17, 0
    %p132 = por %p130, %p131
    %p133 = scmp.ne.s32.totalorder %s119, %s120
    %p134 = scmp.eq.s32.totalorder %s18, 7
    %p135 = por %p133, %p134
    %p137 = scmp.ne.s32.totalorder %s120, %s136
    %p138 = scmp.eq.s32.totalorder %s18, 0
    %p139 = por %p137, %p138
    %s140 = ssub.s32 %s19, %s31
    %s141 = ssub.s32 %s20, %s27
    %s142 = sor.u32 %s140, %s141
    %p143 = scmp.eq.s32.totalorder %s142, 0
    %s145 = sadd.s32 %s144, 1
    %s146 = scalar_select %p143, %s144, %s145
    %p149 = pneg %p143
    %p150 = scmp.eq.s32.totalorder %s12, 7
    %p151 = por %p149, %p150
    %p152 = scmp.ne.s32.totalorder %s144, %s147
    %p153 = scmp.eq.s32.totalorder %s12, 0
    %p154 = por %p152, %p153
    %p155 = scmp.ne.s32.totalorder %s144, %s147
    %p156 = scmp.eq.s32.totalorder %s17, 7
    %p157 = por %p155, %p156
    %p158 = scmp.ne.s32.totalorder %s147, %s148
    %p159 = scmp.eq.s32.totalorder %s17, 0
    %p160 = por %p158, %p159
    %p161 = scmp.ne.s32.totalorder %s147, %s148
    %p162 = scmp.eq.s32.totalorder %s18, 7
    %p163 = por %p161, %p162
    %p165 = scmp.ne.s32.totalorder %s148, %s164
    %p166 = scmp.eq.s32.totalorder %s18, 0
    %p167 = por %p165, %p166
    %s168 = ssub.s32 %s19, %s31
    %s169 = ssub.s32 %s20, %s27
    %s170 = sor.u32 %s168, %s169
    %p171 = scmp.eq.s32.totalorder %s170, 0
    %s173 = sadd.s32 %s172, 1
    %s174 = scalar_select %p171, %s172, %s173
    %p177 = pneg %p171
    %p178 = scmp.eq.s32.totalorder %s12, 7
    %p179 = por %p177, %p178
    %p180 = scmp.ne.s32.totalorder %s172, %s175
    %p181 = scmp.eq.s32.totalorder %s12, 0
    %p182 = por %p180, %p181
    %p183 = scmp.ne.s32.totalorder %s172, %s175
    %p184 = scmp.eq.s32.totalorder %s17, 7
    %p185 = por %p183, %p184
    %p186 = scmp.ne.s32.totalorder %s175, %s176
    %p187 = scmp.eq.s32.totalorder %s17, 0
    %p188 = por %p186, %p187
    %p189 = scmp.ne.s32.totalorder %s175, %s176
    %p190 = scmp.eq.s32.totalorder %s18, 7
    %p191 = por %p189, %p190
    %p193 = scmp.ne.s32.totalorder %s176, %s192
    %p194 = scmp.eq.s32.totalorder %s18, 0
    %p195 = por %p193, %p194
    %p196 = scmp.le.s32.totalorder 1, %s12
    %p197 = scmp.lt.s32.totalorder %s12, 9
    %p198 = pnand %p196, %p197
    %p199 = pneg %p198
    // Predicated region
    $region9: #{transformer_lm_forward.12} parent=5 // pred_check
      _
    $region10: #{transformer_lm_forward.12} parent=5 // pred_check_branch
      %201 = sbr.rel (%p198) target = $region12
    $region11: #{transformer_lm_forward.12} parent=5 // pred_region
      %s202 = ssub.s32 %s12, 1
      // Predicated region
      $region13: #{transformer_lm_forward.12} parent=11 // pred_check
        %p203 = pneg %p106
      $region14: #{transformer_lm_forward.12} parent=11 // pred_check_branch
        %205 = sbr.rel (%p203) target = $region16
      $region15: #{transformer_lm_forward.12} parent=11 // pred_region
        %p206 = scmp.lt.s32.totalorder %s22, 0
        %s207 = scalar_select %p206, %s22, 0
        %s208 = smul.addr %s207, 8
        %s209 = scalar_lea.vmem %s2, %s208
      $region16: #{transformer_lm_forward.12} parent=11 // pred_fallthru
        _
      // Predicated region
      $region17: #{transformer_lm_forward.12} parent=11 // pred_check
        %p210 = pneg %p132
      $region18: #{transformer_lm_forward.12} parent=11 // pred_check_branch
        %212 = sbr.rel (%p210) target = $region20
      $region19: #{transformer_lm_forward.12} parent=11 // pred_region
        %p213 = scmp.lt.s32.totalorder %s22, 0
        %s214 = scalar_select %p213, %s22, 0
        %s215 = smul.addr %s214, 8
        %s216 = scalar_lea.vmem %s3, %s215
      $region20: #{transformer_lm_forward.12} parent=11 // pred_fallthru
        _
    $region12: #{transformer_lm_forward.12} parent=5 // pred_fallthru
      _
    %p217 = scmp.lt.s32.totalorder %s12, 8
    // Predicated region
    $region21: #{transformer_lm_forward.12} parent=5 // pred_check
      %p218 = pneg %p217
    $region22: #{transformer_lm_forward.12} parent=5 // pred_check_branch
      %220 = sbr.rel (%p218) target = $region24
    $region23: #{transformer_lm_forward.12} parent=5 // pred_region
      // Predicated region
      $region25: #{transformer_lm_forward.12} parent=23 // pred_check
        %p221 = pneg %p46
      $region26: #{transformer_lm_forward.12} parent=23 // pred_check_branch
        %223 = sbr.rel (%p221) target = $region28
      $region27: #{transformer_lm_forward.12} parent=23 // pred_region
        %p224 = scmp.lt.s32.totalorder %s19, 7
        %s225 = scalar_select %p224, %s19, 7
        %p226 = scmp.lt.s32.totalorder %s20, 0
        %s227 = scalar_select %p226, %s20, 0
        %s228 = sadd.s32 %s227, %s225
        %s229 = smul.addr %s228, 4
        %s230 = scalar_lea.vmem %s0, %s229
      $region28: #{transformer_lm_forward.12} parent=23 // pred_fallthru
        _
      // Predicated region
      $region29: #{transformer_lm_forward.12} parent=23 // pred_check
        %p231 = pneg %p74
      $region30: #{transformer_lm_forward.12} parent=23 // pred_check_branch
        %233 = sbr.rel (%p231) target = $region32
      $region31: #{transformer_lm_forward.12} parent=23 // pred_region
        %p234 = scmp.lt.s32.totalorder %s19, 7
        %s235 = scalar_select %p234, %s19, 7
        %p236 = scmp.lt.s32.totalorder %s20, 0
        %s237 = scalar_select %p236, %s20, 0
        %s238 = sadd.s32 %s237, %s235
        %s239 = smul.addr %s238, 4
        %s240 = scalar_lea.vmem %s1, %s239
      $region32: #{transformer_lm_forward.12} parent=23 // pred_fallthru
        _
    $region24: #{transformer_lm_forward.12} parent=5 // pred_fallthru
      _
    %p241 = scmp.le.s32.totalorder 1, %s12
    %p242 = scmp.lt.s32.totalorder %s12, 9
    %p243 = pnand %p241, %p242
    %p244 = pneg %p243
    // Predicated region
    $region33: #{transformer_lm_forward.12} parent=5 // pred_check
      _
    $region34: #{transformer_lm_forward.12} parent=5 // pred_check_branch
      %246 = sbr.rel (%p243) target = $region36
    $region35: #{transformer_lm_forward.12} parent=5 // pred_region
      %s247 = ssub.s32 %s12, 1
      %p248 = scmp.lt.s32.totalorder %s21, 7
      %s249 = scalar_select %p248, %s21, 7
      %p250 = scmp.lt.s32.totalorder %s22, 0
      %s251 = scalar_select %p250, %s22, 0
      %s252 = sadd.s32 %s251, %s249
      %s253 = smul.addr %s252, 4
      %s254 = scalar_lea.vmem %s0, %s253
      %p255 = pneg %p52
      %p256 = pneg %p49
      %p257 = scmp.lt.s32.totalorder %s21, 7
      %s258 = scalar_select %p257, %s21, 7
      %p259 = scmp.lt.s32.totalorder %s22, 0
      %s260 = scalar_select %p259, %s22, 0
      %s261 = sadd.s32 %s260, %s258
      %s262 = smul.addr %s261, 4
      %s263 = scalar_lea.vmem %s1, %s262
      %p264 = pneg %p80
      %p265 = pneg %p77
      %p266 = scmp.lt.s32.totalorder %s22, 0
      %s267 = scalar_select %p266, %s22, 0
      %s268 = smul.addr %s267, 8
      %s269 = scalar_lea.vmem %s2, %s268
      %p270 = pneg %p106
      %p271 = pneg %p103
      %p272 = scmp.lt.s32.totalorder %s22, 0
      %s273 = scalar_select %p272, %s22, 0
      %s274 = smul.addr %s273, 8
      %s275 = scalar_lea.vmem %s3, %s274
      %p276 = pneg %p132
      %p277 = pneg %p129
      %p278 = pneg %p160
      %p279 = pneg %p157
      %p280 = scmp.lt.s32.totalorder %s21, 7
      %s281 = scalar_select %p280, %s21, 7
      %p282 = scmp.lt.s32.totalorder %s22, 0
      %s283 = scalar_select %p282, %s22, 0
      %s284 = sadd.s32 %s283, %s281
      %s285 = smul.addr %s284, 4
      %s286 = scalar_lea.vmem %s4, %s285
      %p287 = pneg %p188
      %p288 = pneg %p185
      %p289 = scmp.lt.s32.totalorder %s21, 7
      %s290 = scalar_select %p289, %s21, 7
      %p291 = scmp.lt.s32.totalorder %s22, 0
      %s292 = scalar_select %p291, %s22, 0
      %s293 = sadd.s32 %s292, %s290
      %s294 = smul.addr %s293, 4
      %s295 = scalar_lea.vmem %s5, %s294
      %p296 = scmp.lt.s32.totalorder %s21, 7
      %s297 = scalar_select %p296, %s21, 7
      %p298 = scmp.lt.s32.totalorder %s22, 0
      %s299 = scalar_select %p298, %s22, 0
      %s300 = sadd.s32 %s299, %s297
      %s301 = smul.addr %s300, 4
      %s302 = scalar_lea.vmem %s0, %s301
      %p303 = scmp.lt.s32.totalorder %s21, 7
      %s304 = scalar_select %p303, %s21, 7
      %p305 = scmp.lt.s32.totalorder %s22, 0
      %s306 = scalar_select %p305, %s22, 0
      %s307 = sadd.s32 %s306, %s304
      %s308 = smul.addr %s307, 4
      %s309 = scalar_lea.vmem %s1, %s308
      %p310 = scmp.lt.s32.totalorder %s22, 0
      %s311 = scalar_select %p310, %s22, 0
      %s312 = smul.addr %s311, 8
      %s313 = scalar_lea.vmem %s2, %s312
      %p314 = scmp.lt.s32.totalorder %s22, 0
      %s315 = scalar_select %p314, %s22, 0
      %s316 = smul.addr %s315, 8
      %s317 = scalar_lea.vmem %s3, %s316
      %p318 = scmp.lt.s32.totalorder %s21, 7
      %s319 = scalar_select %p318, %s21, 7
      %p320 = scmp.lt.s32.totalorder %s22, 0
      %s321 = scalar_select %p320, %s22, 0
      %s322 = sadd.s32 %s321, %s319
      %s323 = smul.addr %s322, 4
      %s324 = scalar_lea.vmem %s4, %s323
      %p325 = scmp.lt.s32.totalorder %s21, 7
      %s326 = scalar_select %p325, %s21, 7
      %p327 = scmp.lt.s32.totalorder %s22, 0
      %s328 = scalar_select %p327, %s22, 0
      %s329 = sadd.s32 %s328, %s326
      %s330 = smul.addr %s329, 4
      %s331 = scalar_lea.vmem %s5, %s330
      %v332 = vld [vmem:[%s313] sm:$0xff]
      %v333 = vld [vmem:[%s317] sm:$0xff]
      %v334 = vld [vmem:[%s302] sm:$0xf]
      %v335 = vunpack.c.l.bf16 %v334
      %v336 = vmul.f32 %v335, %v332
      %338 = vrot.lane.b32.xlu0 %v333, 4
      %v339 = vpop.permute.xlu0 %338
      %v341 = vmul.f32 %v335, %v339
      %343 = vrot.lane.b32.xlu0 %v341, 124
      %v344 = vpop.permute.xlu0 %343
      %v346 = vsub.f32 %v336, %v344
      %v347 = vmul.f32 %v335, %v333
      %349 = vrot.lane.b32.xlu0 %v332, 4
      %v350 = vpop.permute.xlu0 %349
      %v352 = vmul.f32 %v335, %v350
      %354 = vrot.lane.b32.xlu0 %v352, 124
      %v355 = vpop.permute.xlu0 %354
      %v357 = vadd.f32 %v347, %v355
      %359 = vrot.lane.b32.xlu0 %v357, 4
      %v360 = vpop.permute.xlu0 %359
      %vm362 = vcmask 31744
      %v363 = vsel %vm362, %v346, %v360
      %v364 = vpack.c.bf16 %v363, %v363
      %vm365 = vcmask 60416
      %366 = vst.msk [vmem:[%s324] sm:$0xf] %vm365, %v364
      %v367 = vld [vmem:[%s309] sm:$0xf]
      %v368 = vunpack.c.l.bf16 %v367
      %v369 = vmul.f32 %v368, %v332
      %v370 = vmul.f32 %v368, %v339
      %372 = vrot.lane.b32.xlu0 %v370, 124
      %v373 = vpop.permute.xlu0 %372
      %v375 = vsub.f32 %v369, %v373
      %v376 = vmul.f32 %v368, %v333
      %v377 = vmul.f32 %v368, %v350
      %379 = vrot.lane.b32.xlu0 %v377, 124
      %v380 = vpop.permute.xlu0 %379
      %v382 = vadd.f32 %v376, %v380
      %384 = vrot.lane.b32.xlu0 %v382, 4
      %v385 = vpop.permute.xlu0 %384
      %v387 = vsel %vm362, %v375, %v385
      %v388 = vpack.c.bf16 %v387, %v387
      %389 = vst.msk [vmem:[%s331] sm:$0xf] %vm365, %v388
      %p390 = scmp.lt.s32.totalorder %s21, 7
      %s391 = scalar_select %p390, %s21, 7
      %p392 = scmp.lt.s32.totalorder %s22, 0
      %s393 = scalar_select %p392, %s22, 0
      %s394 = sadd.s32 %s393, %s391
      %s395 = smul.addr %s394, 4
      %s396 = scalar_lea.vmem %s4, %s395
      %p397 = scmp.lt.s32.totalorder %s21, 7
      %s398 = scalar_select %p397, %s21, 7
      %p399 = scmp.lt.s32.totalorder %s22, 0
      %s400 = scalar_select %p399, %s22, 0
      %s401 = sadd.s32 %s400, %s398
      %s402 = smul.addr %s401, 4
      %s403 = scalar_lea.vmem %s5, %s402
      // Predicated region
      $region37: #{transformer_lm_forward.12} parent=35 // pred_check
        %p404 = pneg %p157
      $region38: #{transformer_lm_forward.12} parent=35 // pred_check_branch
        %406 = sbr.rel (%p404) target = $region40
      $region39: #{transformer_lm_forward.12} parent=35 // pred_region
        _
      $region40: #{transformer_lm_forward.12} parent=35 // pred_fallthru
        _
      // Predicated region
      $region41: #{transformer_lm_forward.12} parent=35 // pred_check
        %p407 = pneg %p185
      $region42: #{transformer_lm_forward.12} parent=35 // pred_check_branch
        %409 = sbr.rel (%p407) target = $region44
      $region43: #{transformer_lm_forward.12} parent=35 // pred_region
        _
      $region44: #{transformer_lm_forward.12} parent=35 // pred_fallthru
        _
    $region36: #{transformer_lm_forward.12} parent=5 // pred_fallthru
      _
    %p410 = scmp.le.s32.totalorder 2, %s12
    // Predicated region
    $region45: #{transformer_lm_forward.12} parent=5 // pred_check
      %p411 = pneg %p410
    $region46: #{transformer_lm_forward.12} parent=5 // pred_check_branch
      %413 = sbr.rel (%p411) target = $region48
    $region47: #{transformer_lm_forward.12} parent=5 // pred_region
      %s414 = ssub.s32 %s12, 2
      // Predicated region
      $region49: #{transformer_lm_forward.12} parent=47 // pred_check
        %p415 = pneg %p163
      $region50: #{transformer_lm_forward.12} parent=47 // pred_check_branch
        %417 = sbr.rel (%p415) target = $region52
      $region51: #{transformer_lm_forward.12} parent=47 // pred_region
        %p418 = scmp.lt.s32.totalorder %s23, 7
        %s419 = scalar_select %p418, %s23, 7
        %p420 = scmp.lt.s32.totalorder %s24, 0
        %s421 = scalar_select %p420, %s24, 0
        %s422 = sadd.s32 %s421, %s419
        %s423 = smul.addr %s422, 4
        %s424 = scalar_lea.vmem %s4, %s423
      $region52: #{transformer_lm_forward.12} parent=47 // pred_fallthru
        _
      // Predicated region
      $region53: #{transformer_lm_forward.12} parent=47 // pred_check
        %p425 = pneg %p191
      $region54: #{transformer_lm_forward.12} parent=47 // pred_check_branch
        %427 = sbr.rel (%p425) target = $region56
      $region55: #{transformer_lm_forward.12} parent=47 // pred_region
        %p428 = scmp.lt.s32.totalorder %s23, 7
        %s429 = scalar_select %p428, %s23, 7
        %p430 = scmp.lt.s32.totalorder %s24, 0
        %s431 = scalar_select %p430, %s24, 0
        %s432 = sadd.s32 %s431, %s429
        %s433 = smul.addr %s432, 4
        %s434 = scalar_lea.vmem %s5, %s433
      $region56: #{transformer_lm_forward.12} parent=47 // pred_fallthru
        _
    $region48: #{transformer_lm_forward.12} parent=5 // pred_fallthru
      _
  $region6: #{transformer_lm_forward.12} parent=0 // loop_footer
    %s16 = sadd.s32 1, %s12
  $region7: #{transformer_lm_forward.12} parent=0 // loop_footer_branch
    %11 = sbr.rel target = $region3
  $region8: #{transformer_lm_forward.12} parent=0 // loop_exit
    _

// kernel: transformer_lm_forward.11
$region0: #{transformer_lm_forward.11}
  #allocation0 [shape = 'u32[]', space=smem, size = 0x4, offset = 0x4, fixed_abs, tag = 'smem constant byte address 0x4 - core index']
  #allocation1 [shape = 'u32[144,128]{1,0:T(1,128)}', space=vmem, size = 0x12000, scoped, tag = 'internal scratch']
  #allocation2 [shape = 'bf16[16,32]{1,0:T(16,128)(2,1)}', space=vmem, size = 0x1000, scoped, tag = 'scratch operand']
  %s0 = inlined_call_operand.vmem [shape: bf16[16,32], index: 0, kind: input, shape index: {}]
  %s1 = inlined_call_operand.vmem [shape: f32[1,32], index: 1, kind: input, shape index: {}]
  %s2 = inlined_call_operand.vmem [shape: bf16[32,96], index: 2, kind: input, shape index: {}]
  %s3 = inlined_call_operand.vmem [shape: bf16[16,96], index: 3, kind: output, shape index: {}]
  %s4 = sld [smem:[#allocation0]]
  $region26: #{transformer_lm_forward.11} parent=0
    _
  %s6 = ssub.s32 1, %s4
  %s7 = scalar_select 0, %s6, %s4
  // Predicated region
  $region2: #{transformer_lm_forward.11} parent=0 // pred_check
    _
  $region3: #{transformer_lm_forward.11} parent=0 // pred_check_branch
    %9 = sbr.rel (0) target = $region5
  $region4: #{transformer_lm_forward.11} parent=0 // pred_region
    _
  $region5: #{transformer_lm_forward.11} parent=0 // pred_fallthru
    _
  // Predicated region
  $region6: #{transformer_lm_forward.11} parent=0 // pred_check
    _
  $region7: #{transformer_lm_forward.11} parent=0 // pred_check_branch
    %11 = sbr.rel (0) target = $region9
  $region8: #{transformer_lm_forward.11} parent=0 // pred_region
    _
  $region9: #{transformer_lm_forward.11} parent=0 // pred_fallthru
    _
  // Predicated region
  $region10: #{transformer_lm_forward.11} parent=0 // pred_check
    _
  $region11: #{transformer_lm_forward.11} parent=0 // pred_check_branch
    %13 = sbr.rel (0) target = $region13
  $region12: #{transformer_lm_forward.11} parent=0 // pred_region
    _
  $region13: #{transformer_lm_forward.11} parent=0 // pred_fallthru
    _
  %p15 = scmp.eq.s32.totalorder 0, 0
  // Predicated region
  $region14: #{transformer_lm_forward.11} parent=0 // pred_check
    %p16 = pneg %p15
  $region15: #{transformer_lm_forward.11} parent=0 // pred_check_branch
    %18 = sbr.rel (%p16) target = $region17
  $region16: #{transformer_lm_forward.11} parent=0 // pred_region
    %v19 = vld [vmem:[%s0] sm:$0xf]
    %v20 = vld [vmem:[%s0 + $0x4] sm:$0xf]
    %v21 = vunpack.c.l.bf16 %v19
    %v22 = vunpack.c.l.bf16 %v20
    %v23 = vmul.f32 %v21, %v21
    %v24 = vmul.f32 %v22, %v22
    %vm25 = vcmask 261120
    %v26 = vsel %vm25, %v23, 0.0
    %27 = vadd.xlane.f32.xlu0 %v26
    %v28 = vpop.xlane.xlu0 %27
    %v29 = vsel %vm25, %v24, 0.0
    %30 = vadd.xlane.f32.xlu0 %v29
    %v31 = vpop.xlane.xlu0 %30
    %v32 = vrcp.pop 32.0
    %v33 = vmul.f32 %v28, %v32
    %v34 = vmul.f32 %v31, %v32
    %v35 = vadd.f32 %v33, 1e-05
    %v36 = vadd.f32 %v34, 1e-05
    %v37 = vrsqrt.pop %v35
    %v38 = vrsqrt.pop %v36
    %v39 = vmul.f32 %v21, %v37
    %v40 = vmul.f32 %v22, %v38
    %v41 = vld [vmem:[%s1] sm:$0x1]
    %v43 = vlaneseq
    %v44 = vshrl.u32 %v43, 7
    %v45 = vsub.s32 0, %v44
    %v46 = vrot.slane %v41, %v45
    %v48 = vmul.f32 %v39, %v46
    %v49 = vmul.f32 %v40, %v46
    %v50 = vpack.c.bf16 %v49, %v48
    %51 = vst.msk [vmem:[#allocation2] sm:$0xff] %vm25, %v50
  $region17: #{transformer_lm_forward.11} parent=0 // pred_fallthru
    _
  %v52 = vld [vmem:[#allocation2] sm:$0xff]
  %v53 = vld [vmem:[%s2] sm:$0xf]
  %v54 = vld [vmem:[%s2 + $0x4] sm:$0xf]
  %v55 = vld [vmem:[%s2 + $0x8] sm:$0xf]
  %v56 = vld [vmem:[%s2 + $0xc] sm:$0xf]
  %v61 = vunpack.c.l.b16 %v53
  %v62 = vunpack.c.l.b16 %v54
  %v63 = vunpack.c.l.b16 %v55
  %v64 = vunpack.c.l.b16 %v56
  %v65 = vpack.c.b16 %v62, %v61
  %v66 = vpack.c.b16 %v64, %v63
  %vm69 = vcmask 261120
  %v71 = vsel %vm69, %v52, 0
  %73 = vmatprep.subr.bf16.mxu0 0
  %74 = vmatpush1.bf16.msra.mxu0 %v65
  %75 = vmatprep.subr.bf16.mxu0 0
  %76 = vmatpush1.bf16.msra.mxu0 %v66
  %77 = vmatprep.subr.bf16.mxu0 0
  %78 = vmatpush1.bf16.msra.mxu0 0
  %79 = vmatprep.subr.bf16.mxu0 0
  %80 = vmatpush1.bf16.msra.mxu0 0
  %81 = vmatprep.subr.bf16.mxu0 0
  %82 = vmatpush1.bf16.msra.mxu0 0
  %83 = vmatprep.subr.bf16.mxu0 0
  %84 = vmatpush1.bf16.msra.mxu0 0
  %85 = vmatprep.subr.bf16.mxu0 0
  %86 = vmatpush1.bf16.msra.mxu0 0
  %87 = vmatprep.subr.bf16.mxu0 0
  %88 = vmatpush1.bf16.msra.mxu0 0
  %89 = vmatprep.subr.bf16.mxu0 0
  %90 = vmatpush1.bf16.msra.mxu0 0
  %91 = vmatprep.subr.bf16.mxu0 0
  %92 = vmatpush1.bf16.msra.mxu0 0
  %93 = vmatprep.subr.bf16.mxu0 0
  %94 = vmatpush1.bf16.msra.mxu0 0
  %95 = vmatprep.subr.bf16.mxu0 0
  %96 = vmatpush1.bf16.msra.mxu0 0
  %97 = vmatprep.subr.bf16.mxu0 0
  %98 = vmatpush1.bf16.msra.mxu0 0
  %99 = vmatprep.subr.bf16.mxu0 0
  %100 = vmatpush1.bf16.msra.mxu0 0
  %101 = vmatprep.subr.bf16.mxu0 0
  %102 = vmatpush1.bf16.msra.mxu0 0
  %103 = vmatprep.subr.bf16.mxu0 0
  %104 = vmatpush1.bf16.msra.mxu0 0
  %105 = vmatprep.mubr.bf16.mxu0 0
  %106 = vmatmul.mubr.bf16.gmra.mrb[0].mxu0 %v71
  %v107 = vpop.f32.mrb[0].mxu0
  %v108 = vadd.f32 0.0, %v107
  %v109 = vpop.f32.mrb[0].mxu0
  %v110 = vpop.f32.mrb[0].mxu0
  %v111 = vadd.f32 0.0, %v110
  %v112 = vpop.f32.mrb[0].mxu0
  %113 = vdwg.mxu0
  %v114 = vpack.c.bf16 %v111, %v108
  %v116 = vunpack.c.l.b16 %v114
  %v117 = vunpack.c.h.b16 %v114
  %v118 = vpack.c.b16 %v116, %v116
  %v119 = vpack.c.b16 %v117, %v117
  %vm122 = vcmask 781312
  %123 = vst.msk [vmem:[%s3] sm:$0xf] %vm122, %v118
  %124 = vst.msk [vmem:[%s3 + $0x4] sm:$0xf] %vm122, %v119
  // Predicated region
  $region18: #{transformer_lm_forward.11} parent=0 // pred_check
    _
  $region19: #{transformer_lm_forward.11} parent=0 // pred_check_branch
    %126 = sbr.rel (0) target = $region21
  $region20: #{transformer_lm_forward.11} parent=0 // pred_region
    _
  $region21: #{transformer_lm_forward.11} parent=0 // pred_fallthru
    _
  // Predicated region
  $region22: #{transformer_lm_forward.11} parent=0 // pred_check
    _
  $region23: #{transformer_lm_forward.11} parent=0 // pred_check_branch
    %128 = sbr.rel (0) target = $region25
  $region24: #{transformer_lm_forward.11} parent=0 // pred_region
    _
  $region25: #{transformer_lm_forward.11} parent=0 // pred_fallthru
    _

// kernel: transformer_lm_forward.13
$region0: #{transformer_lm_forward.13}
  #allocation0 [shape = 'u32[]', space=smem, size = 0x4, offset = 0x4, fixed_abs, tag = 'smem constant byte address 0x4 - core index']
  #allocation1 [shape = 'u32[144,128]{1,0:T(1,128)}', space=vmem, size = 0x12000, scoped, tag = 'internal scratch']
  #allocation2 [shape = 'f32[8,1]{1,0:T(8,128)}', space=vmem, size = 0x1000, scoped, tag = 'scratch operand']
  #allocation3 [shape = 'f32[8,1]{1,0:T(8,128)}', space=vmem, size = 0x1000, scoped, tag = 'scratch operand']
  #allocation4 [shape = 'f32[8,8]{1,0:T(8,128)}', space=vmem, size = 0x1000, scoped, tag = 'scratch operand']
  %s0 = inlined_call_operand.vmem [shape: bf16[8,8,8], index: 0, kind: input, shape index: {}]
  %s1 = inlined_call_operand.vmem [shape: bf16[8,8,8], index: 1, kind: input, shape index: {}]
  %s2 = inlined_call_operand.vmem [shape: bf16[8,8,8], index: 2, kind: input, shape index: {}]
  %s3 = inlined_call_operand.vmem [shape: bf16[8,8,8], index: 3, kind: output, shape index: {}]
  %s4 = sld [smem:[#allocation0]]
  $region57: #{transformer_lm_forward.13} parent=0
    _
  %s6 = ssub.s32 1, %s4
  %s7 = scalar_select 0, %s6, %s4
  loop: start=0, step=1, limit=10
  $region2: #{transformer_lm_forward.13} parent=0 // loop_pre_header
    _
  $region3: #{transformer_lm_forward.13} parent=0 // loop_header
    %s9 = sphi 0, %s13
    %p10 = scmp.ge.s32.totalorder %s9, 10
    %s16 = sphi 0, %s35
    %s17 = sphi 0, %s31
    %s18 = sphi 0, %s27
    %s19 = sphi 0, %s16
    %s20 = sphi 0, %s17
    %s21 = sphi 0, %s18
    %s22 = sphi 0, %s19
    %s23 = sphi 0, %s20
    %s24 = sphi 0, %s21
    %s40 = sphi 0, %s42
    %s43 = sphi 0, %s40
    %s44 = sphi 0, %s43
    %s60 = sphi 0, %s44
    %s72 = sphi 0, %s74
    %s75 = sphi 0, %s72
    %s76 = sphi 0, %s75
    %s92 = sphi 0, %s76
    %s104 = sphi 0, %s106
    %s107 = sphi 0, %s104
    %s108 = sphi 0, %s107
    %s124 = sphi 0, %s108
    %s132 = sphi 0, %s134
    %s135 = sphi 0, %s132
    %s136 = sphi 0, %s135
    %s152 = sphi 0, %s136
  $region4: #{transformer_lm_forward.13} parent=0 // loop_header_branch
    %12 = sbr.rel (%p10) target = $region8
  $region5: #{transformer_lm_forward.13} parent=0 // loop_body
    %s14 = ssub.s32 %s9, 1
    %s15 = ssub.s32 %s9, 2
    %s25 = sadd.s32 1, %s18
    %p26 = scmp.ge.s32.totalorder %s25, 1
    %s27 = scalar_select %p26, 0, %s25
    %s28 = sadd.s32 1, %s17
    %s29 = scalar_select %p26, %s28, %s17
    %p30 = scmp.ge.s32.totalorder %s29, 1
    %s31 = scalar_select %p30, 0, %s29
    %s32 = sadd.s32 1, %s16
    %s33 = scalar_select %p30, %s32, %s16
    %p34 = scmp.ge.s32.totalorder %s33, 8
    %s35 = scalar_select %p34, 0, %s33
    %s36 = ssub.s32 %s16, %s35
    %s37 = ssub.s32 %s17, %s31
    %s38 = sor.u32 %s36, %s37
    %p39 = scmp.eq.s32.totalorder %s38, 0
    %s41 = sadd.s32 %s40, 1
    %s42 = scalar_select %p39, %s40, %s41
    %p45 = pneg %p39
    %p46 = scmp.eq.s32.totalorder %s9, 7
    %p47 = por %p45, %p46
    %p48 = scmp.ne.s32.totalorder %s40, %s43
    %p49 = scmp.eq.s32.totalorder %s9, 0
    %p50 = por %p48, %p49
    %p51 = scmp.ne.s32.totalorder %s40, %s43
    %p52 = scmp.eq.s32.totalorder %s14, 7
    %p53 = por %p51, %p52
    %p54 = scmp.ne.s32.totalorder %s43, %s44
    %p55 = scmp.eq.s32.totalorder %s14, 0
    %p56 = por %p54, %p55
    %p57 = scmp.ne.s32.totalorder %s43, %s44
    %p58 = scmp.eq.s32.totalorder %s15, 7
    %p59 = por %p57, %p58
    %p61 = scmp.ne.s32.totalorder %s44, %s60
    %p62 = scmp.eq.s32.totalorder %s15, 0
    %p63 = por %p61, %p62
    %p64 = scmp.lt.s32.totalorder %s18, %s17
    %s65 = scalar_select %p64, %s18, %s17
    %p66 = scmp.lt.s32.totalorder %s27, %s31
    %s67 = scalar_select %p66, %s27, %s31
    %s68 = ssub.s32 %s16, %s35
    %s69 = ssub.s32 %s65, %s67
    %s70 = sor.u32 %s68, %s69
    %p71 = scmp.eq.s32.totalorder %s70, 0
    %s73 = sadd.s32 %s72, 1
    %s74 = scalar_select %p71, %s72, %s73
    %p77 = pneg %p71
    %p78 = scmp.eq.s32.totalorder %s9, 7
    %p79 = por %p77, %p78
    %p80 = scmp.ne.s32.totalorder %s72, %s75
    %p81 = scmp.eq.s32.totalorder %s9, 0
    %p82 = por %p80, %p81
    %p83 = scmp.ne.s32.totalorder %s72, %s75
    %p84 = scmp.eq.s32.totalorder %s14, 7
    %p85 = por %p83, %p84
    %p86 = scmp.ne.s32.totalorder %s75, %s76
    %p87 = scmp.eq.s32.totalorder %s14, 0
    %p88 = por %p86, %p87
    %p89 = scmp.ne.s32.totalorder %s75, %s76
    %p90 = scmp.eq.s32.totalorder %s15, 7
    %p91 = por %p89, %p90
    %p93 = scmp.ne.s32.totalorder %s76, %s92
    %p94 = scmp.eq.s32.totalorder %s15, 0
    %p95 = por %p93, %p94
    %p96 = scmp.lt.s32.totalorder %s18, %s17
    %s97 = scalar_select %p96, %s18, %s17
    %p98 = scmp.lt.s32.totalorder %s27, %s31
    %s99 = scalar_select %p98, %s27, %s31
    %s100 = ssub.s32 %s16, %s35
    %s101 = ssub.s32 %s97, %s99
    %s102 = sor.u32 %s100, %s101
    %p103 = scmp.eq.s32.totalorder %s102, 0
    %s105 = sadd.s32 %s104, 1
    %s106 = scalar_select %p103, %s104, %s105
    %p109 = pneg %p103
    %p110 = scmp.eq.s32.totalorder %s9, 7
    %p111 = por %p109, %p110
    %p112 = scmp.ne.s32.totalorder %s104, %s107
    %p113 = scmp.eq.s32.totalorder %s9, 0
    %p114 = por %p112, %p113
    %p115 = scmp.ne.s32.totalorder %s104, %s107
    %p116 = scmp.eq.s32.totalorder %s14, 7
    %p117 = por %p115, %p116
    %p118 = scmp.ne.s32.totalorder %s107, %s108
    %p119 = scmp.eq.s32.totalorder %s14, 0
    %p120 = por %p118, %p119
    %p121 = scmp.ne.s32.totalorder %s107, %s108
    %p122 = scmp.eq.s32.totalorder %s15, 7
    %p123 = por %p121, %p122
    %p125 = scmp.ne.s32.totalorder %s108, %s124
    %p126 = scmp.eq.s32.totalorder %s15, 0
    %p127 = por %p125, %p126
    %s128 = ssub.s32 %s16, %s35
    %s129 = ssub.s32 %s17, %s31
    %s130 = sor.u32 %s128, %s129
    %p131 = scmp.eq.s32.totalorder %s130, 0
    %s133 = sadd.s32 %s132, 1
    %s134 = scalar_select %p131, %s132, %s133
    %p137 = pneg %p131
    %p138 = scmp.eq.s32.totalorder %s9, 7
    %p139 = por %p137, %p138
    %p140 = scmp.ne.s32.totalorder %s132, %s135
    %p141 = scmp.eq.s32.totalorder %s9, 0
    %p142 = por %p140, %p141
    %p143 = scmp.ne.s32.totalorder %s132, %s135
    %p144 = scmp.eq.s32.totalorder %s14, 7
    %p145 = por %p143, %p144
    %p146 = scmp.ne.s32.totalorder %s135, %s136
    %p147 = scmp.eq.s32.totalorder %s14, 0
    %p148 = por %p146, %p147
    %p149 = scmp.ne.s32.totalorder %s135, %s136
    %p150 = scmp.eq.s32.totalorder %s15, 7
    %p151 = por %p149, %p150
    %p153 = scmp.ne.s32.totalorder %s136, %s152
    %p154 = scmp.eq.s32.totalorder %s15, 0
    %p155 = por %p153, %p154
    %p156 = scmp.le.s32.totalorder 1, %s9
    %p157 = scmp.lt.s32.totalorder %s9, 9
    %p158 = pnand %p156, %p157
    %p159 = pneg %p158
    // Predicated region
    $region9: #{transformer_lm_forward.13} parent=5 // pred_check
      _
    $region10: #{transformer_lm_forward.13} parent=5 // pred_check_branch
      %161 = sbr.rel (%p158) target = $region12
    $region11: #{transformer_lm_forward.13} parent=5 // pred_region
      %s162 = ssub.s32 %s9, 1
    $region12: #{transformer_lm_forward.13} parent=5 // pred_fallthru
      _
    %p163 = scmp.lt.s32.totalorder %s9, 8
    // Predicated region
    $region13: #{transformer_lm_forward.13} parent=5 // pred_check
      %p164 = pneg %p163
    $region14: #{transformer_lm_forward.13} parent=5 // pred_check_branch
      %166 = sbr.rel (%p164) target = $region16
    $region15: #{transformer_lm_forward.13} parent=5 // pred_region
      // Predicated region
      $region17: #{transformer_lm_forward.13} parent=15 // pred_check
        %p167 = pneg %p50
      $region18: #{transformer_lm_forward.13} parent=15 // pred_check_branch
        %169 = sbr.rel (%p167) target = $region20
      $region19: #{transformer_lm_forward.13} parent=15 // pred_region
        %p170 = scmp.lt.s32.totalorder %s16, 7
        %s171 = scalar_select %p170, %s16, 7
        %p172 = scmp.lt.s32.totalorder %s17, 0
        %s173 = scalar_select %p172, %s17, 0
        %s174 = sadd.s32 %s173, %s171
        %s175 = smul.addr %s174, 4
        %s176 = scalar_lea.vmem %s0, %s175
      $region20: #{transformer_lm_forward.13} parent=15 // pred_fallthru
        _
      // Predicated region
      $region21: #{transformer_lm_forward.13} parent=15 // pred_check
        %p177 = pneg %p82
      $region22: #{transformer_lm_forward.13} parent=15 // pred_check_branch
        %179 = sbr.rel (%p177) target = $region24
      $region23: #{transformer_lm_forward.13} parent=15 // pred_region
        %p180 = scmp.lt.s32.totalorder %s18, %s17
        %s181 = scalar_select %p180, %s18, %s17
        %p182 = scmp.lt.s32.totalorder %s16, 7
        %s183 = scalar_select %p182, %s16, 7
        %p184 = scmp.lt.s32.totalorder %s181, 0
        %s185 = scalar_select %p184, %s181, 0
        %s186 = sadd.s32 %s185, %s183
        %s187 = smul.addr %s186, 4
        %s188 = scalar_lea.vmem %s1, %s187
        %p189 = scmp.lt.s32.totalorder %s18, %s17
        %s190 = scalar_select %p189, %s18, %s17
      $region24: #{transformer_lm_forward.13} parent=15 // pred_fallthru
        _
      // Predicated region
      $region25: #{transformer_lm_forward.13} parent=15 // pred_check
        %p191 = pneg %p114
      $region26: #{transformer_lm_forward.13} parent=15 // pred_check_branch
        %193 = sbr.rel (%p191) target = $region28
      $region27: #{transformer_lm_forward.13} parent=15 // pred_region
        %p194 = scmp.lt.s32.totalorder %s18, %s17
        %s195 = scalar_select %p194, %s18, %s17
        %p196 = scmp.lt.s32.totalorder %s16, 7
        %s197 = scalar_select %p196, %s16, 7
        %p198 = scmp.lt.s32.totalorder %s195, 0
        %s199 = scalar_select %p198, %s195, 0
        %s200 = sadd.s32 %s199, %s197
        %s201 = smul.addr %s200, 4
        %s202 = scalar_lea.vmem %s2, %s201
        %p203 = scmp.lt.s32.totalorder %s18, %s17
        %s204 = scalar_select %p203, %s18, %s17
      $region28: #{transformer_lm_forward.13} parent=15 // pred_fallthru
        _
    $region16: #{transformer_lm_forward.13} parent=5 // pred_fallthru
      _
    %p205 = scmp.le.s32.totalorder 1, %s9
    %p206 = scmp.lt.s32.totalorder %s9, 9
    %p207 = pnand %p205, %p206
    %p208 = pneg %p207
    // Predicated region
    $region29: #{transformer_lm_forward.13} parent=5 // pred_check
      _
    $region30: #{transformer_lm_forward.13} parent=5 // pred_check_branch
      %210 = sbr.rel (%p207) target = $region32
    $region31: #{transformer_lm_forward.13} parent=5 // pred_region
      %s211 = ssub.s32 %s9, 1
      %p212 = scmp.lt.s32.totalorder %s19, 7
      %s213 = scalar_select %p212, %s19, 7
      %p214 = scmp.lt.s32.totalorder %s20, 0
      %s215 = scalar_select %p214, %s20, 0
      %s216 = sadd.s32 %s215, %s213
      %s217 = smul.addr %s216, 4
      %s218 = scalar_lea.vmem %s0, %s217
      %p219 = pneg %p56
      %p220 = pneg %p53
      %p221 = scmp.lt.s32.totalorder %s21, %s20
      %s222 = scalar_select %p221, %s21, %s20
      %p223 = scmp.lt.s32.totalorder %s19, 7
      %s224 = scalar_select %p223, %s19, 7
      %p225 = scmp.lt.s32.totalorder %s222, 0
      %s226 = scalar_select %p225, %s222, 0
      %s227 = sadd.s32 %s226, %s224
      %s228 = smul.addr %s227, 4
      %s229 = scalar_lea.vmem %s1, %s228
      %p230 = pneg %p88
      %p231 = pneg %p85
      %p232 = scmp.lt.s32.totalorder %s21, %s20
      %s233 = scalar_select %p232, %s21, %s20
      %p234 = scmp.lt.s32.totalorder %s19, 7
      %s235 = scalar_select %p234, %s19, 7
      %p236 = scmp.lt.s32.totalorder %s233, 0
      %s237 = scalar_select %p236, %s233, 0
      %s238 = sadd.s32 %s237, %s235
      %s239 = smul.addr %s238, 4
      %s240 = scalar_lea.vmem %s2, %s239
      %p241 = pneg %p120
      %p242 = pneg %p117
      %p243 = pneg %p148
      %p244 = pneg %p145
      %p245 = scmp.lt.s32.totalorder %s19, 7
      %s246 = scalar_select %p245, %s19, 7
      %p247 = scmp.lt.s32.totalorder %s20, 0
      %s248 = scalar_select %p247, %s20, 0
      %s249 = sadd.s32 %s248, %s246
      %s250 = smul.addr %s249, 4
      %s251 = scalar_lea.vmem %s3, %s250
      %p252 = scmp.lt.s32.totalorder %s19, 7
      %s253 = scalar_select %p252, %s19, 7
      %p254 = scmp.lt.s32.totalorder %s20, 0
      %s255 = scalar_select %p254, %s20, 0
      %s256 = sadd.s32 %s255, %s253
      %s257 = smul.addr %s256, 4
      %s258 = scalar_lea.vmem %s0, %s257
      %p259 = scmp.lt.s32.totalorder %s21, %s20
      %s260 = scalar_select %p259, %s21, %s20
      %p261 = scmp.lt.s32.totalorder %s19, 7
      %s262 = scalar_select %p261, %s19, 7
      %p263 = scmp.lt.s32.totalorder %s260, 0
      %s264 = scalar_select %p263, %s260, 0
      %s265 = sadd.s32 %s264, %s262
      %s266 = smul.addr %s265, 4
      %s267 = scalar_lea.vmem %s1, %s266
      %p268 = scmp.lt.s32.totalorder %s21, %s20
      %s269 = scalar_select %p268, %s21, %s20
      %p270 = scmp.lt.s32.totalorder %s21, %s20
      %s271 = scalar_select %p270, %s21, %s20
      %p272 = scmp.lt.s32.totalorder %s19, 7
      %s273 = scalar_select %p272, %s19, 7
      %p274 = scmp.lt.s32.totalorder %s271, 0
      %s275 = scalar_select %p274, %s271, 0
      %s276 = sadd.s32 %s275, %s273
      %s277 = smul.addr %s276, 4
      %s278 = scalar_lea.vmem %s2, %s277
      %p279 = scmp.lt.s32.totalorder %s21, %s20
      %s280 = scalar_select %p279, %s21, %s20
      %p281 = scmp.lt.s32.totalorder %s19, 7
      %s282 = scalar_select %p281, %s19, 7
      %p283 = scmp.lt.s32.totalorder %s20, 0
      %s284 = scalar_select %p283, %s20, 0
      %s285 = sadd.s32 %s284, %s282
      %s286 = smul.addr %s285, 4
      %s287 = scalar_lea.vmem %s3, %s286
      %p289 = scmp.eq.s32.totalorder %s21, 0
      // Predicated region
      $region33: #{transformer_lm_forward.13} parent=31 // pred_check
        %p290 = pneg %p289
      $region34: #{transformer_lm_forward.13} parent=31 // pred_check_branch
        %292 = sbr.rel (%p290) target = $region36
      $region35: #{transformer_lm_forward.13} parent=31 // pred_region
        %vm293 = vcmask 7168
        %294 = vst.msk [vmem:[#allocation2] sm:$0xff] %vm293, -1e+30
        %295 = vst.msk [vmem:[#allocation3] sm:$0xff] %vm293, 0.0
        %vm296 = vcmask 64512
        %297 = vst.msk [vmem:[#allocation4] sm:$0xff] %vm296, 0.0
      $region36: #{transformer_lm_forward.13} parent=31 // pred_fallthru
        _
      %p298 = scmp.le.s32.totalorder %s21, %s20
      // Predicated region
      $region37: #{transformer_lm_forward.13} parent=31 // pred_check
        %p299 = pneg %p298
      $region38: #{transformer_lm_forward.13} parent=31 // pred_check_branch
        %301 = sbr.rel (%p299) target = $region40
      $region39: #{transformer_lm_forward.13} parent=31 // pred_region
        %v302 = vld [vmem:[%s258] sm:$0xf]
        %v303 = vld [vmem:[%s267] sm:$0xf]
        %vm304 = vcmask 64512
        %v306 = vsel %vm304, %v302, 0
        %v309 = vsel %vm304, %v303, 0
        %311 = vmatprep.subr.bf16.mxu0 0
        %312 = vmatpush1.bf16.xpose.msra.mxu0 %v309
        %313 = vmatprep.subr.bf16.mxu0 0
        %314 = vmatpush1.bf16.xpose.msra.mxu0 0
        %315 = vmatprep.subr.bf16.mxu0 0
        %316 = vmatpush1.bf16.xpose.msra.mxu0 0
        %317 = vmatprep.subr.bf16.mxu0 0
        %318 = vmatpush1.bf16.xpose.msra.mxu0 0
        %319 = vmatprep.subr.bf16.mxu0 0
        %320 = vmatpush1.bf16.xpose.msra.mxu0 0
        %321 = vmatprep.subr.bf16.mxu0 0
        %322 = vmatpush1.bf16.xpose.msra.mxu0 0
        %323 = vmatprep.subr.bf16.mxu0 0
        %324 = vmatpush1.bf16.xpose.msra.mxu0 0
        %325 = vmatprep.subr.bf16.mxu0 0
        %326 = vmatpush1.bf16.xpose.msra.mxu0 0
        %327 = vmatprep.subr.bf16.mxu0 0
        %328 = vmatpush1.bf16.xpose.msra.mxu0 0
        %329 = vmatprep.subr.bf16.mxu0 0
        %330 = vmatpush1.bf16.xpose.msra.mxu0 0
        %331 = vmatprep.subr.bf16.mxu0 0
        %332 = vmatpush1.bf16.xpose.msra.mxu0 0
        %333 = vmatprep.subr.bf16.mxu0 0
        %334 = vmatpush1.bf16.xpose.msra.mxu0 0
        %335 = vmatprep.subr.bf16.mxu0 0
        %336 = vmatpush1.bf16.xpose.msra.mxu0 0
        %337 = vmatprep.subr.bf16.mxu0 0
        %338 = vmatpush1.bf16.xpose.msra.mxu0 0
        %339 = vmatprep.subr.bf16.mxu0 0
        %340 = vmatpush1.bf16.xpose.msra.mxu0 0
        %341 = vmatprep.subr.bf16.mxu0 0
        %342 = vmatpush1.bf16.xpose.msra.mxu0 0
        %343 = vmatprep.mubr.bf16.mxu0 0
        %344 = vmatmul.mubr.bf16.gmra.mrb[0].mxu0 %v306
        %v345 = vpop.f32.mrb[0].mxu0
        %v346 = vadd.f32 0.0, %v345
        %v347 = vpop.f32.mrb[0].mxu0
        %v348 = vpop.f32.mrb[0].mxu0
        %v349 = vpop.f32.mrb[0].mxu0
        %350 = vdwg.mxu0
        %s351 = smul.u32 %s20, 8
        %v352 = vlaneseq
        %v353 = vshrl.u32 %v352, 7
        %v354 = vstv %s351
        %v355 = vadd.s32 %v354, %v353
        %s356 = smul.u32 %s21, 8
        %v357 = vlaneseq
        %v358 = vand.u32 %v357, 127
        %v359 = vstv %s356
        %v360 = vadd.s32 %v359, %v358
        %vm361 = vcmp.le.s32.totalorder %v360, %v355
        %v362 = vsel %vm361, %v346, -1e+30
        %v363 = vld [vmem:[#allocation2] sm:$0xff]
        %v364 = vsel %vm304, %v362, -inf
        %365 = vmax.xlane.f32.xlu0 %v364
        %v366 = vpop.xlane.xlu0 %365
        %v367 = vmax.f32 %v363, %v366
        %v368 = vsub.f32 %v363, %v367
        %v369 = vmul.f32 %v368, 1.442695
        %v370 = vpow.pop %v369
        %372 = vset.pattern.permute.xlu0 0
        %373 = vperm.xlu0 %372, %v367
        %v374 = vpop.permute.xlu0 %373
        %v376 = vsub.f32 %v362, %v374
        %v377 = vmul.f32 %v376, 1.442695
        %v378 = vpow.pop %v377
        %v379 = vld [vmem:[#allocation3] sm:$0xff]
        %v380 = vmul.f32 %v370, %v379
        %v381 = vsel %vm304, %v378, 0.0
        %382 = vadd.xlane.f32.xlu0 %v381
        %v383 = vpop.xlane.xlu0 %382
        %v384 = vadd.f32 %v380, %v383
        %vm385 = vcmask 7168
        %386 = vst.msk [vmem:[#allocation3] sm:$0xff] %vm385, %v384
        %v387 = vld [vmem:[#allocation4] sm:$0xff]
        %389 = vset.pattern.permute.xlu0 0
        %390 = vperm.xlu0 %389, %v370
        %v391 = vpop.permute.xlu0 %390
        %v393 = vmul.f32 %v391, %v387
        %v394 = vpack.c.bf16 %v378, %v378
        %v395 = vld [vmem:[%s278] sm:$0xf]
        %v397 = vsel %vm304, %v394, 0
        %vm399 = vcmask 1043456
        %v401 = vsel %vm399, %v395, 0
        %403 = vmatprep.subr.bf16.mxu0 0
        %404 = vmatpush1.bf16.msra.mxu0 %v401
        %405 = vmatprep.subr.bf16.mxu0 0
        %406 = vmatpush1.bf16.msra.mxu0 0
        %407 = vmatprep.subr.bf16.mxu0 0
        %408 = vmatpush1.bf16.msra.mxu0 0
        %409 = vmatprep.subr.bf16.mxu0 0
        %410 = vmatpush1.bf16.msra.mxu0 0
        %411 = vmatprep.subr.bf16.mxu0 0
        %412 = vmatpush1.bf16.msra.mxu0 0
        %413 = vmatprep.subr.bf16.mxu0 0
        %414 = vmatpush1.bf16.msra.mxu0 0
        %415 = vmatprep.subr.bf16.mxu0 0
        %416 = vmatpush1.bf16.msra.mxu0 0
        %417 = vmatprep.subr.bf16.mxu0 0
        %418 = vmatpush1.bf16.msra.mxu0 0
        %419 = vmatprep.subr.bf16.mxu0 0
        %420 = vmatpush1.bf16.msra.mxu0 0
        %421 = vmatprep.subr.bf16.mxu0 0
        %422 = vmatpush1.bf16.msra.mxu0 0
        %423 = vmatprep.subr.bf16.mxu0 0
        %424 = vmatpush1.bf16.msra.mxu0 0
        %425 = vmatprep.subr.bf16.mxu0 0
        %426 = vmatpush1.bf16.msra.mxu0 0
        %427 = vmatprep.subr.bf16.mxu0 0
        %428 = vmatpush1.bf16.msra.mxu0 0
        %429 = vmatprep.subr.bf16.mxu0 0
        %430 = vmatpush1.bf16.msra.mxu0 0
        %431 = vmatprep.subr.bf16.mxu0 0
        %432 = vmatpush1.bf16.msra.mxu0 0
        %433 = vmatprep.subr.bf16.mxu0 0
        %434 = vmatpush1.bf16.msra.mxu0 0
        %435 = vmatprep.mubr.bf16.mxu0 0
        %436 = vmatmul.mubr.bf16.gmra.mrb[0].mxu0 %v397
        %v437 = vpop.f32.mrb[0].mxu0
        %v438 = vadd.f32 0.0, %v437
        %v439 = vpop.f32.mrb[0].mxu0
        %v440 = vpop.f32.mrb[0].mxu0
        %v441 = vpop.f32.mrb[0].mxu0
        %442 = vdwg.mxu0
        %v443 = vadd.f32 %v393, %v438
        %444 = vst.msk [vmem:[#allocation4] sm:$0xff] %vm304, %v443
        %445 = vst.msk [vmem:[#allocation2] sm:$0xff] %vm385, %v367
      $region40: #{transformer_lm_forward.13} parent=31 // pred_fallthru
        _
      // Predicated region
      $region41: #{transformer_lm_forward.13} parent=31 // pred_check
        %p446 = pneg %p289
      $region42: #{transformer_lm_forward.13} parent=31 // pred_check_branch
        %448 = sbr.rel (%p446) target = $region44
      $region43: #{transformer_lm_forward.13} parent=31 // pred_region
        %v449 = vld [vmem:[#allocation4] sm:$0xff]
        %v450 = vld [vmem:[#allocation3] sm:$0xff]
        %v451 = vrcp.pop %v450
        %453 = vset.pattern.permute.xlu0 0
        %454 = vperm.xlu0 %453, %v451
        %v455 = vpop.permute.xlu0 %454
        %v457 = vmul.f32 %v449, %v455
        %v458 = vpack.c.bf16 %v457, %v457
        %vm459 = vcmask 60416
        %460 = vst.msk [vmem:[%s287] sm:$0xf] %vm459, %v458
      $region44: #{transformer_lm_forward.13} parent=31 // pred_fallthru
        _
      %p461 = scmp.lt.s32.totalorder %s19, 7
      %s462 = scalar_select %p461, %s19, 7
      %p463 = scmp.lt.s32.totalorder %s20, 0
      %s464 = scalar_select %p463, %s20, 0
      %s465 = sadd.s32 %s464, %s462
      %s466 = smul.addr %s465, 4
      %s467 = scalar_lea.vmem %s3, %s466
      // Predicated region
      $region45: #{transformer_lm_forward.13} parent=31 // pred_check
        %p468 = pneg %p145
      $region46: #{transformer_lm_forward.13} parent=31 // pred_check_branch
        %470 = sbr.rel (%p468) target = $region48
      $region47: #{transformer_lm_forward.13} parent=31 // pred_region
        _
      $region48: #{transformer_lm_forward.13} parent=31 // pred_fallthru
        _
    $region32: #{transformer_lm_forward.13} parent=5 // pred_fallthru
      _
    %p471 = scmp.le.s32.totalorder 2, %s9
    // Predicated region
    $region49: #{transformer_lm_forward.13} parent=5 // pred_check
      %p472 = pneg %p471
    $region50: #{transformer_lm_forward.13} parent=5 // pred_check_branch
      %474 = sbr.rel (%p472) target = $region52
    $region51: #{transformer_lm_forward.13} parent=5 // pred_region
      %s475 = ssub.s32 %s9, 2
      // Predicated region
      $region53: #{transformer_lm_forward.13} parent=51 // pred_check
        %p476 = pneg %p151
      $region54: #{transformer_lm_forward.13} parent=51 // pred_check_branch
        %478 = sbr.rel (%p476) target = $region56
      $region55: #{transformer_lm_forward.13} parent=51 // pred_region
        %p479 = scmp.lt.s32.totalorder %s22, 7
        %s480 = scalar_select %p479, %s22, 7
        %p481 = scmp.lt.s32.totalorder %s23, 0
        %s482 = scalar_select %p481, %s23, 0
        %s483 = sadd.s32 %s482, %s480
        %s484 = smul.addr %s483, 4
        %s485 = scalar_lea.vmem %s3, %s484
      $region56: #{transformer_lm_forward.13} parent=51 // pred_fallthru
        _
    $region52: #{transformer_lm_forward.13} parent=5 // pred_fallthru
      _
  $region6: #{transformer_lm_forward.13} parent=0 // loop_footer
    %s13 = sadd.s32 1, %s9
  $region7: #{transformer_lm_forward.13} parent=0 // loop_footer_branch
    %8 = sbr.rel target = $region3
  $region8: #{transformer_lm_forward.13} parent=0 // loop_exit
    _

// kernel: transformer_lm_forward.14
$region0: #{transformer_lm_forward.14}
  #allocation0 [shape = 'u32[]', space=smem, size = 0x4, offset = 0x4, fixed_abs, tag = 'smem constant byte address 0x4 - core index']
  #allocation1 [shape = 'u32[144,128]{1,0:T(1,128)}', space=vmem, size = 0x12000, scoped, tag = 'internal scratch']
  #allocation2 [shape = 'f32[16,32]{1,0:T(8,128)}', space=vmem, size = 0x2000, scoped, tag = 'scratch operand']
  %s0 = inlined_call_operand.vmem [shape: bf16[16,32], index: 0, kind: input, shape index: {}]
  %s1 = inlined_call_operand.vmem [shape: bf16[32,32], index: 1, kind: input, shape index: {}]
  %s2 = inlined_call_operand.vmem [shape: bf16[16,32], index: 2, kind: input, shape index: {}]
  %s3 = inlined_call_operand.vmem [shape: bf16[16,32], index: 3, kind: output, shape index: {}]
  %s4 = sld [smem:[#allocation0]]
  $region30: #{transformer_lm_forward.14} parent=0
    _
  %s6 = ssub.s32 1, %s4
  %s7 = scalar_select 0, %s6, %s4
  // Predicated region
  $region2: #{transformer_lm_forward.14} parent=0 // pred_check
    _
  $region3: #{transformer_lm_forward.14} parent=0 // pred_check_branch
    %9 = sbr.rel (0) target = $region5
  $region4: #{transformer_lm_forward.14} parent=0 // pred_region
    _
  $region5: #{transformer_lm_forward.14} parent=0 // pred_fallthru
    _
  // Predicated region
  $region6: #{transformer_lm_forward.14} parent=0 // pred_check
    _
  $region7: #{transformer_lm_forward.14} parent=0 // pred_check_branch
    %11 = sbr.rel (0) target = $region9
  $region8: #{transformer_lm_forward.14} parent=0 // pred_region
    _
  $region9: #{transformer_lm_forward.14} parent=0 // pred_fallthru
    _
  // Predicated region
  $region10: #{transformer_lm_forward.14} parent=0 // pred_check
    _
  $region11: #{transformer_lm_forward.14} parent=0 // pred_check_branch
    %13 = sbr.rel (0) target = $region13
  $region12: #{transformer_lm_forward.14} parent=0 // pred_region
    _
  $region13: #{transformer_lm_forward.14} parent=0 // pred_fallthru
    _
  %p15 = scmp.eq.s32.totalorder 0, 0
  // Predicated region
  $region14: #{transformer_lm_forward.14} parent=0 // pred_check
    %p16 = pneg %p15
  $region15: #{transformer_lm_forward.14} parent=0 // pred_check_branch
    %18 = sbr.rel (%p16) target = $region17
  $region16: #{transformer_lm_forward.14} parent=0 // pred_region
    %vm19 = vcmask 261120
    %20 = vst.msk [vmem:[#allocation2] sm:$0xff] %vm19, 0.0
    %21 = vst.msk [vmem:[#allocation2 + $0x8] sm:$0xff] %vm19, 0.0
  $region17: #{transformer_lm_forward.14} parent=0 // pred_fallthru
    _
  %v22 = vld [vmem:[#allocation2] sm:$0xff]
  %v23 = vld [vmem:[#allocation2 + $0x8] sm:$0xff]
  %v24 = vld [vmem:[%s0] sm:$0xf]
  %v25 = vld [vmem:[%s0 + $0x4] sm:$0xf]
  %v26 = vld [vmem:[%s1] sm:$0xf]
  %v27 = vld [vmem:[%s1 + $0x4] sm:$0xf]
  %v28 = vld [vmem:[%s1 + $0x8] sm:$0xf]
  %v29 = vld [vmem:[%s1 + $0xc] sm:$0xf]
  %v32 = vunpack.c.l.b16 %v24
  %v33 = vunpack.c.l.b16 %v25
  %v34 = vpack.c.b16 %v33, %v32
  %v39 = vunpack.c.l.b16 %v26
  %v40 = vunpack.c.l.b16 %v27
  %v41 = vunpack.c.l.b16 %v28
  %v42 = vunpack.c.l.b16 %v29
  %v43 = vpack.c.b16 %v40, %v39
  %v44 = vpack.c.b16 %v42, %v41
  %vm47 = vcmask 261120
  %v49 = vsel %vm47, %v34, 0
  %51 = vmatprep.subr.bf16.mxu0 0
  %52 = vmatpush1.bf16.msra.mxu0 %v43
  %53 = vmatprep.subr.bf16.mxu0 0
  %54 = vmatpush1.bf16.msra.mxu0 %v44
  %55 = vmatprep.subr.bf16.mxu0 0
  %56 = vmatpush1.bf16.msra.mxu0 0
  %57 = vmatprep.subr.bf16.mxu0 0
  %58 = vmatpush1.bf16.msra.mxu0 0
  %59 = vmatprep.subr.bf16.mxu0 0
  %60 = vmatpush1.bf16.msra.mxu0 0
  %61 = vmatprep.subr.bf16.mxu0 0
  %62 = vmatpush1.bf16.msra.mxu0 0
  %63 = vmatprep.subr.bf16.mxu0 0
  %64 = vmatpush1.bf16.msra.mxu0 0
  %65 = vmatprep.subr.bf16.mxu0 0
  %66 = vmatpush1.bf16.msra.mxu0 0
  %67 = vmatprep.subr.bf16.mxu0 0
  %68 = vmatpush1.bf16.msra.mxu0 0
  %69 = vmatprep.subr.bf16.mxu0 0
  %70 = vmatpush1.bf16.msra.mxu0 0
  %71 = vmatprep.subr.bf16.mxu0 0
  %72 = vmatpush1.bf16.msra.mxu0 0
  %73 = vmatprep.subr.bf16.mxu0 0
  %74 = vmatpush1.bf16.msra.mxu0 0
  %75 = vmatprep.subr.bf16.mxu0 0
  %76 = vmatpush1.bf16.msra.mxu0 0
  %77 = vmatprep.subr.bf16.mxu0 0
  %78 = vmatpush1.bf16.msra.mxu0 0
  %79 = vmatprep.subr.bf16.mxu0 0
  %80 = vmatpush1.bf16.msra.mxu0 0
  %81 = vmatprep.subr.bf16.mxu0 0
  %82 = vmatpush1.bf16.msra.mxu0 0
  %83 = vmatprep.mubr.bf16.mxu0 0
  %84 = vmatmul.mubr.bf16.gmra.mrb[0].mxu0 %v49
  %v85 = vpop.f32.mrb[0].mxu0
  %v86 = vadd.f32 0.0, %v85
  %v87 = vpop.f32.mrb[0].mxu0
  %v88 = vpop.f32.mrb[0].mxu0
  %v89 = vadd.f32 0.0, %v88
  %v90 = vpop.f32.mrb[0].mxu0
  %91 = vdwg.mxu0
  %v92 = vadd.f32 %v22, %v86
  %v93 = vadd.f32 %v23, %v89
  %94 = vst.msk [vmem:[#allocation2] sm:$0xff] %vm47, %v92
  %95 = vst.msk [vmem:[#allocation2 + $0x8] sm:$0xff] %vm47, %v93
  // Predicated region
  $region18: #{transformer_lm_forward.14} parent=0 // pred_check
    %p96 = pneg %p15
  $region19: #{transformer_lm_forward.14} parent=0 // pred_check_branch
    %98 = sbr.rel (%p96) target = $region21
  $region20: #{transformer_lm_forward.14} parent=0 // pred_region
    %v99 = vld [vmem:[#allocation2] sm:$0xff]
    %v100 = vld [vmem:[#allocation2 + $0x8] sm:$0xff]
    %v101 = vld [vmem:[%s2] sm:$0xf]
    %v102 = vld [vmem:[%s2 + $0x4] sm:$0xf]
    %v103 = vunpack.c.l.bf16 %v101
    %v104 = vunpack.c.l.bf16 %v102
    %v105 = vadd.f32 %v99, %v103
    %v106 = vadd.f32 %v100, %v104
    %v107 = vpack.c.bf16 %v106, %v105
    %v109 = vunpack.c.l.b16 %v107
    %v110 = vunpack.c.h.b16 %v107
    %v111 = vpack.c.b16 %v109, %v109
    %v112 = vpack.c.b16 %v110, %v110
    %vm115 = vcmask 257024
    %116 = vst.msk [vmem:[%s3] sm:$0xf] %vm115, %v111
    %117 = vst.msk [vmem:[%s3 + $0x4] sm:$0xf] %vm115, %v112
  $region21: #{transformer_lm_forward.14} parent=0 // pred_fallthru
    _
  // Predicated region
  $region22: #{transformer_lm_forward.14} parent=0 // pred_check
    _
  $region23: #{transformer_lm_forward.14} parent=0 // pred_check_branch
    %119 = sbr.rel (0) target = $region25
  $region24: #{transformer_lm_forward.14} parent=0 // pred_region
    _
  $region25: #{transformer_lm_forward.14} parent=0 // pred_fallthru
    _
  // Predicated region
  $region26: #{transformer_lm_forward.14} parent=0 // pred_check
    _
  $region27: #{transformer_lm_forward.14} parent=0 // pred_check_branch
    %121 = sbr.rel (0) target = $region29
  $region28: #{transformer_lm_forward.14} parent=0 // pred_region
    _
  $region29: #{transformer_lm_forward.14} parent=0 // pred_fallthru
    _

// kernel: transformer_lm_forward.15
$region0: #{transformer_lm_forward.15}
  #allocation0 [shape = 'u32[]', space=smem, size = 0x4, offset = 0x4, fixed_abs, tag = 'smem constant byte address 0x4 - core index']
  #allocation1 [shape = 'u32[144,128]{1,0:T(1,128)}', space=vmem, size = 0x12000, scoped, tag = 'internal scratch']
  #allocation2 [shape = 'bf16[16,32]{1,0:T(16,128)(2,1)}', space=vmem, size = 0x1000, scoped, tag = 'scratch operand']
  #allocation3 [shape = 'f32[16,32]{1,0:T(8,128)}', space=vmem, size = 0x2000, scoped, tag = 'scratch operand']
  %s0 = inlined_call_operand.vmem [shape: bf16[16,32], index: 0, kind: input, shape index: {}]
  %s1 = inlined_call_operand.vmem [shape: f32[1,32], index: 1, kind: input, shape index: {}]
  %s2 = inlined_call_operand.vmem [shape: bf16[32,64], index: 2, kind: input, shape index: {}]
  %s3 = inlined_call_operand.vmem [shape: bf16[32,64], index: 3, kind: input, shape index: {}]
  %s4 = inlined_call_operand.vmem [shape: bf16[64,32], index: 4, kind: input, shape index: {}]
  %s5 = inlined_call_operand.vmem [shape: bf16[16,32], index: 5, kind: output, shape index: {}]
  %s6 = sld [smem:[#allocation0]]
  $region38: #{transformer_lm_forward.15} parent=0
    _
  %s8 = ssub.s32 1, %s6
  %s9 = scalar_select 0, %s8, %s6
  // Predicated region
  $region2: #{transformer_lm_forward.15} parent=0 // pred_check
    _
  $region3: #{transformer_lm_forward.15} parent=0 // pred_check_branch
    %11 = sbr.rel (0) target = $region5
  $region4: #{transformer_lm_forward.15} parent=0 // pred_region
    _
  $region5: #{transformer_lm_forward.15} parent=0 // pred_fallthru
    _
  // Predicated region
  $region6: #{transformer_lm_forward.15} parent=0 // pred_check
    _
  $region7: #{transformer_lm_forward.15} parent=0 // pred_check_branch
    %13 = sbr.rel (0) target = $region9
  $region8: #{transformer_lm_forward.15} parent=0 // pred_region
    _
  $region9: #{transformer_lm_forward.15} parent=0 // pred_fallthru
    _
  // Predicated region
  $region10: #{transformer_lm_forward.15} parent=0 // pred_check
    _
  $region11: #{transformer_lm_forward.15} parent=0 // pred_check_branch
    %15 = sbr.rel (0) target = $region13
  $region12: #{transformer_lm_forward.15} parent=0 // pred_region
    _
  $region13: #{transformer_lm_forward.15} parent=0 // pred_fallthru
    _
  // Predicated region
  $region14: #{transformer_lm_forward.15} parent=0 // pred_check
    _
  $region15: #{transformer_lm_forward.15} parent=0 // pred_check_branch
    %17 = sbr.rel (0) target = $region17
  $region16: #{transformer_lm_forward.15} parent=0 // pred_region
    _
  $region17: #{transformer_lm_forward.15} parent=0 // pred_fallthru
    _
  // Predicated region
  $region18: #{transformer_lm_forward.15} parent=0 // pred_check
    _
  $region19: #{transformer_lm_forward.15} parent=0 // pred_check_branch
    %19 = sbr.rel (0) target = $region21
  $region20: #{transformer_lm_forward.15} parent=0 // pred_region
    _
  $region21: #{transformer_lm_forward.15} parent=0 // pred_fallthru
    _
  %p21 = scmp.eq.s32.totalorder 0, 0
  // Predicated region
  $region22: #{transformer_lm_forward.15} parent=0 // pred_check
    %p22 = pneg %p21
  $region23: #{transformer_lm_forward.15} parent=0 // pred_check_branch
    %24 = sbr.rel (%p22) target = $region25
  $region24: #{transformer_lm_forward.15} parent=0 // pred_region
    %v25 = vld [vmem:[%s0] sm:$0xf]
    %v26 = vld [vmem:[%s0 + $0x4] sm:$0xf]
    %v27 = vunpack.c.l.bf16 %v25
    %v28 = vunpack.c.l.bf16 %v26
    %v29 = vmul.f32 %v27, %v27
    %v30 = vmul.f32 %v28, %v28
    %vm31 = vcmask 261120
    %v32 = vsel %vm31, %v29, 0.0
    %33 = vadd.xlane.f32.xlu0 %v32
    %v34 = vpop.xlane.xlu0 %33
    %v35 = vsel %vm31, %v30, 0.0
    %36 = vadd.xlane.f32.xlu0 %v35
    %v37 = vpop.xlane.xlu0 %36
    %v38 = vrcp.pop 32.0
    %v39 = vmul.f32 %v34, %v38
    %v40 = vmul.f32 %v37, %v38
    %v41 = vadd.f32 %v39, 1e-05
    %v42 = vadd.f32 %v40, 1e-05
    %v43 = vrsqrt.pop %v41
    %v44 = vrsqrt.pop %v42
    %v45 = vmul.f32 %v27, %v43
    %v46 = vmul.f32 %v28, %v44
    %v47 = vld [vmem:[%s1] sm:$0x1]
    %v49 = vlaneseq
    %v50 = vshrl.u32 %v49, 7
    %v51 = vsub.s32 0, %v50
    %v52 = vrot.slane %v47, %v51
    %v54 = vmul.f32 %v45, %v52
    %v55 = vmul.f32 %v46, %v52
    %v56 = vpack.c.bf16 %v55, %v54
    %57 = vst.msk [vmem:[#allocation2] sm:$0xff] %vm31, %v56
    %58 = vst.msk [vmem:[#allocation3] sm:$0xff] %vm31, 0.0
    %59 = vst.msk [vmem:[#allocation3 + $0x8] sm:$0xff] %vm31, 0.0
  $region25: #{transformer_lm_forward.15} parent=0 // pred_fallthru
    _
  %v60 = vld [vmem:[#allocation2] sm:$0xff]
  %v61 = vld [vmem:[%s2] sm:$0xf]
  %v62 = vld [vmem:[%s2 + $0x4] sm:$0xf]
  %v63 = vld [vmem:[%s2 + $0x8] sm:$0xf]
  %v64 = vld [vmem:[%s2 + $0xc] sm:$0xf]
  %v69 = vunpack.c.l.b16 %v61
  %v70 = vunpack.c.l.b16 %v62
  %v71 = vunpack.c.l.b16 %v63
  %v72 = vunpack.c.l.b16 %v64
  %v73 = vpack.c.b16 %v70, %v69
  %v74 = vpack.c.b16 %v72, %v71
  %vm77 = vcmask 261120
  %v79 = vsel %vm77, %v60, 0
  %81 = vmatprep.subr.bf16.mxu0 0
  %82 = vmatpush1.bf16.msra.mxu0 %v73
  %83 = vmatprep.subr.bf16.mxu0 0
  %84 = vmatpush1.bf16.msra.mxu0 %v74
  %85 = vmatprep.subr.bf16.mxu0 0
  %86 = vmatpush1.bf16.msra.mxu0 0
  %87 = vmatprep.subr.bf16.mxu0 0
  %88 = vmatpush1.bf16.msra.mxu0 0
  %89 = vmatprep.subr.bf16.mxu0 0
  %90 = vmatpush1.bf16.msra.mxu0 0
  %91 = vmatprep.subr.bf16.mxu0 0
  %92 = vmatpush1.bf16.msra.mxu0 0
  %93 = vmatprep.subr.bf16.mxu0 0
  %94 = vmatpush1.bf16.msra.mxu0 0
  %95 = vmatprep.subr.bf16.mxu0 0
  %96 = vmatpush1.bf16.msra.mxu0 0
  %97 = vmatprep.subr.bf16.mxu0 0
  %98 = vmatpush1.bf16.msra.mxu0 0
  %99 = vmatprep.subr.bf16.mxu0 0
  %100 = vmatpush1.bf16.msra.mxu0 0
  %101 = vmatprep.subr.bf16.mxu0 0
  %102 = vmatpush1.bf16.msra.mxu0 0
  %103 = vmatprep.subr.bf16.mxu0 0
  %104 = vmatpush1.bf16.msra.mxu0 0
  %105 = vmatprep.subr.bf16.mxu0 0
  %106 = vmatpush1.bf16.msra.mxu0 0
  %107 = vmatprep.subr.bf16.mxu0 0
  %108 = vmatpush1.bf16.msra.mxu0 0
  %109 = vmatprep.subr.bf16.mxu0 0
  %110 = vmatpush1.bf16.msra.mxu0 0
  %111 = vmatprep.subr.bf16.mxu0 0
  %112 = vmatpush1.bf16.msra.mxu0 0
  %113 = vmatprep.mubr.bf16.mxu0 0
  %114 = vmatmul.mubr.bf16.gmra.mrb[0].mxu0 %v79
  %v115 = vpop.f32.mrb[0].mxu0
  %v116 = vadd.f32 0.0, %v115
  %v117 = vpop.f32.mrb[0].mxu0
  %v118 = vpop.f32.mrb[0].mxu0
  %v119 = vadd.f32 0.0, %v118
  %v120 = vpop.f32.mrb[0].mxu0
  %121 = vdwg.mxu0
  %v122 = vld [vmem:[%s3] sm:$0xf]
  %v123 = vld [vmem:[%s3 + $0x4] sm:$0xf]
  %v124 = vld [vmem:[%s3 + $0x8] sm:$0xf]
  %v125 = vld [vmem:[%s3 + $0xc] sm:$0xf]
  %v130 = vunpack.c.l.b16 %v122
  %v131 = vunpack.c.l.b16 %v123
  %v132 = vunpack.c.l.b16 %v124
  %v133 = vunpack.c.l.b16 %v125
  %v134 = vpack.c.b16 %v131, %v130
  %v135 = vpack.c.b16 %v133, %v132
  %138 = vmatprep.subr.bf16.mxu0 0
  %139 = vmatpush1.bf16.msra.mxu0 %v134
  %140 = vmatprep.subr.bf16.mxu0 0
  %141 = vmatpush1.bf16.msra.mxu0 %v135
  %142 = vmatprep.subr.bf16.mxu0 0
  %143 = vmatpush1.bf16.msra.mxu0 0
  %144 = vmatprep.subr.bf16.mxu0 0
  %145 = vmatpush1.bf16.msra.mxu0 0
  %146 = vmatprep.subr.bf16.mxu0 0
  %147 = vmatpush1.bf16.msra.mxu0 0
  %148 = vmatprep.subr.bf16.mxu0 0
  %149 = vmatpush1.bf16.msra.mxu0 0
  %150 = vmatprep.subr.bf16.mxu0 0
  %151 = vmatpush1.bf16.msra.mxu0 0
  %152 = vmatprep.subr.bf16.mxu0 0
  %153 = vmatpush1.bf16.msra.mxu0 0
  %154 = vmatprep.subr.bf16.mxu0 0
  %155 = vmatpush1.bf16.msra.mxu0 0
  %156 = vmatprep.subr.bf16.mxu0 0
  %157 = vmatpush1.bf16.msra.mxu0 0
  %158 = vmatprep.subr.bf16.mxu0 0
  %159 = vmatpush1.bf16.msra.mxu0 0
  %160 = vmatprep.subr.bf16.mxu0 0
  %161 = vmatpush1.bf16.msra.mxu0 0
  %162 = vmatprep.subr.bf16.mxu0 0
  %163 = vmatpush1.bf16.msra.mxu0 0
  %164 = vmatprep.subr.bf16.mxu0 0
  %165 = vmatpush1.bf16.msra.mxu0 0
  %166 = vmatprep.subr.bf16.mxu0 0
  %167 = vmatpush1.bf16.msra.mxu0 0
  %168 = vmatprep.subr.bf16.mxu0 0
  %169 = vmatpush1.bf16.msra.mxu0 0
  %170 = vmatprep.mubr.bf16.mxu0 0
  %171 = vmatmul.mubr.bf16.gmra.mrb[0].mxu0 %v79
  %v172 = vpop.f32.mrb[0].mxu0
  %v173 = vadd.f32 0.0, %v172
  %v174 = vpop.f32.mrb[0].mxu0
  %v175 = vpop.f32.mrb[0].mxu0
  %v176 = vadd.f32 0.0, %v175
  %v177 = vpop.f32.mrb[0].mxu0
  %178 = vdwg.mxu0
  %v179 = vxor.u32 %v116, 2147483648
  %v180 = vxor.u32 %v119, 2147483648
  %v181 = vmul.f32 %v179, 1.442695
  %v182 = vpow.pop %v181
  %v183 = vmul.f32 %v180, 1.442695
  %v184 = vpow.pop %v183
  %v185 = vadd.f32 %v182, 1.0
  %v186 = vadd.f32 %v184, 1.0
  %v187 = vrcp.pop %v185
  %v188 = vmul.f32 1.0, %v187
  %v189 = vrcp.pop %v186
  %v190 = vmul.f32 1.0, %v189
  %v191 = vmul.f32 %v116, %v188
  %v192 = vmul.f32 %v119, %v190
  %v193 = vmul.f32 %v191, %v173
  %v194 = vmul.f32 %v192, %v176
  %v195 = vpack.c.bf16 %v194, %v193
  %v196 = vld [vmem:[#allocation3] sm:$0xff]
  %v197 = vld [vmem:[#allocation3 + $0x8] sm:$0xff]
  %v198 = vld [vmem:[%s4] sm:$0xf]
  %v199 = vld [vmem:[%s4 + $0x4] sm:$0xf]
  %v200 = vld [vmem:[%s4 + $0x8] sm:$0xf]
  %v201 = vld [vmem:[%s4 + $0xc] sm:$0xf]
  %v202 = vld [vmem:[%s4 + $0x10] sm:$0xf]
  %v203 = vld [vmem:[%s4 + $0x14] sm:$0xf]
  %v204 = vld [vmem:[%s4 + $0x18] sm:$0xf]
  %v205 = vld [vmem:[%s4 + $0x1c] sm:$0xf]
  %v214 = vunpack.c.l.b16 %v198
  %v215 = vunpack.c.l.b16 %v199
  %v216 = vunpack.c.l.b16 %v200
  %v217 = vunpack.c.l.b16 %v201
  %v218 = vunpack.c.l.b16 %v202
  %v219 = vunpack.c.l.b16 %v203
  %v220 = vunpack.c.l.b16 %v204
  %v221 = vunpack.c.l.b16 %v205
  %v222 = vpack.c.b16 %v215, %v214
  %v223 = vpack.c.b16 %v217, %v216
  %v224 = vpack.c.b16 %v219, %v218
  %v225 = vpack.c.b16 %v221, %v220
  %vm230 = vcmask 523264
  %v232 = vsel %vm230, %v195, 0
  %234 = vmatprep.subr.bf16.mxu0 0
  %235 = vmatpush1.bf16.msra.mxu0 %v222
  %236 = vmatprep.subr.bf16.mxu0 0
  %237 = vmatpush1.bf16.msra.mxu0 %v223
  %238 = vmatprep.subr.bf16.mxu0 0
  %239 = vmatpush1.bf16.msra.mxu0 %v224
  %240 = vmatprep.subr.bf16.mxu0 0
  %241 = vmatpush1.bf16.msra.mxu0 %v225
  %242 = vmatprep.subr.bf16.mxu0 0
  %243 = vmatpush1.bf16.msra.mxu0 0
  %244 = vmatprep.subr.bf16.mxu0 0
  %245 = vmatpush1.bf16.msra.mxu0 0
  %246 = vmatprep.subr.bf16.mxu0 0
  %247 = vmatpush1.bf16.msra.mxu0 0
  %248 = vmatprep.subr.bf16.mxu0 0
  %249 = vmatpush1.bf16.msra.mxu0 0
  %250 = vmatprep.subr.bf16.mxu0 0
  %251 = vmatpush1.bf16.msra.mxu0 0
  %252 = vmatprep.subr.bf16.mxu0 0
  %253 = vmatpush1.bf16.msra.mxu0 0
  %254 = vmatprep.subr.bf16.mxu0 0
  %255 = vmatpush1.bf16.msra.mxu0 0
  %256 = vmatprep.subr.bf16.mxu0 0
  %257 = vmatpush1.bf16.msra.mxu0 0
  %258 = vmatprep.subr.bf16.mxu0 0
  %259 = vmatpush1.bf16.msra.mxu0 0
  %260 = vmatprep.subr.bf16.mxu0 0
  %261 = vmatpush1.bf16.msra.mxu0 0
  %262 = vmatprep.subr.bf16.mxu0 0
  %263 = vmatpush1.bf16.msra.mxu0 0
  %264 = vmatprep.subr.bf16.mxu0 0
  %265 = vmatpush1.bf16.msra.mxu0 0
  %266 = vmatprep.mubr.bf16.mxu0 0
  %267 = vmatmul.mubr.bf16.gmra.mrb[0].mxu0 %v232
  %v268 = vpop.f32.mrb[0].mxu0
  %v269 = vadd.f32 0.0, %v268
  %v270 = vpop.f32.mrb[0].mxu0
  %v271 = vpop.f32.mrb[0].mxu0
  %v272 = vadd.f32 0.0, %v271
  %v273 = vpop.f32.mrb[0].mxu0
  %274 = vdwg.mxu0
  %v275 = vadd.f32 %v196, %v269
  %v276 = vadd.f32 %v197, %v272
  %277 = vst.msk [vmem:[#allocation3] sm:$0xff] %vm77, %v275
  %278 = vst.msk [vmem:[#allocation3 + $0x8] sm:$0xff] %vm77, %v276
  // Predicated region
  $region26: #{transformer_lm_forward.15} parent=0 // pred_check
    %p279 = pneg %p21
  $region27: #{transformer_lm_forward.15} parent=0 // pred_check_branch
    %281 = sbr.rel (%p279) target = $region29
  $region28: #{transformer_lm_forward.15} parent=0 // pred_region
    %v282 = vld [vmem:[#allocation3] sm:$0xff]
    %v283 = vld [vmem:[#allocation3 + $0x8] sm:$0xff]
    %v284 = vld [vmem:[%s0] sm:$0xf]
    %v285 = vld [vmem:[%s0 + $0x4] sm:$0xf]
    %v286 = vunpack.c.l.bf16 %v284
    %v287 = vunpack.c.l.bf16 %v285
    %v288 = vadd.f32 %v282, %v286
    %v289 = vadd.f32 %v283, %v287
    %v290 = vpack.c.bf16 %v289, %v288
    %v292 = vunpack.c.l.b16 %v290
    %v293 = vunpack.c.h.b16 %v290
    %v294 = vpack.c.b16 %v292, %v292
    %v295 = vpack.c.b16 %v293, %v293
    %vm298 = vcmask 257024
    %299 = vst.msk [vmem:[%s5] sm:$0xf] %vm298, %v294
    %300 = vst.msk [vmem:[%s5 + $0x4] sm:$0xf] %vm298, %v295
  $region29: #{transformer_lm_forward.15} parent=0 // pred_fallthru
    _
  // Predicated region
  $region30: #{transformer_lm_forward.15} parent=0 // pred_check
    _
  $region31: #{transformer_lm_forward.15} parent=0 // pred_check_branch
    %302 = sbr.rel (0) target = $region33
  $region32: #{transformer_lm_forward.15} parent=0 // pred_region
    _
  $region33: #{transformer_lm_forward.15} parent=0 // pred_fallthru
    _
  // Predicated region
  $region34: #{transformer_lm_forward.15} parent=0 // pred_check
    _
  $region35: #{transformer_lm_forward.15} parent=0 // pred_check_branch
    %304 = sbr.rel (0) target = $region37
  $region36: #{transformer_lm_forward.15} parent=0 // pred_region
    _
  $region37: #{transformer_lm_forward.15} parent=0 // pred_fallthru
    _

// kernel: transformer_lm_forward.21
$region0: #{transformer_lm_forward.21}
  #allocation0 [shape = 'u32[]', space=smem, size = 0x4, offset = 0x4, fixed_abs, tag = 'smem constant byte address 0x4 - core index']
  #allocation1 [shape = 'u32[144,128]{1,0:T(1,128)}', space=vmem, size = 0x12000, scoped, tag = 'internal scratch']
  #allocation2 [shape = 'bf16[16,32]{1,0:T(16,128)(2,1)}', space=vmem, size = 0x1000, scoped, tag = 'scratch operand']
  %s0 = inlined_call_operand.vmem [shape: bf16[16,32], index: 0, kind: input, shape index: {}]
  %s1 = inlined_call_operand.vmem [shape: f32[1,32], index: 1, kind: input, shape index: {}]
  %s2 = inlined_call_operand.vmem [shape: bf16[32,64], index: 2, kind: input, shape index: {}]
  %s3 = inlined_call_operand.hbm [shape: f32[16,64], index: 3, kind: output, shape index: {}]
  %s4 = sld [smem:[#allocation0]]
  $region26: #{transformer_lm_forward.21} parent=0
    _
  %s6 = ssub.s32 1, %s4
  %s7 = scalar_select 0, %s6, %s4
  $region1: #{transformer_lm_forward.21} parent=0
    #allocation3 [shape = 'u8[8192]{0}', space=vmem, size = 0x2000, scoped, tag = 'output window, operand 0, single buffered']
    #allocation4 [shape = 's32[1]{0}', space=sflag, size = 0x4, scoped, tag = 'scoped memory for transformer_lm_forward.21']
    %8 = vsyncpa [#allocation4], 0
    // Predicated region
    $region2: #{transformer_lm_forward.21} parent=1 // pred_check
      _
    $region3: #{transformer_lm_forward.21} parent=1 // pred_check_branch
      %10 = sbr.rel (0) target = $region5
    $region4: #{transformer_lm_forward.21} parent=1 // pred_region
      _
    $region5: #{transformer_lm_forward.21} parent=1 // pred_fallthru
      _
    // Predicated region
    $region6: #{transformer_lm_forward.21} parent=1 // pred_check
      _
    $region7: #{transformer_lm_forward.21} parent=1 // pred_check_branch
      %12 = sbr.rel (0) target = $region9
    $region8: #{transformer_lm_forward.21} parent=1 // pred_region
      _
    $region9: #{transformer_lm_forward.21} parent=1 // pred_fallthru
      _
    // Predicated region
    $region10: #{transformer_lm_forward.21} parent=1 // pred_check
      _
    $region11: #{transformer_lm_forward.21} parent=1 // pred_check_branch
      %14 = sbr.rel (0) target = $region13
    $region12: #{transformer_lm_forward.21} parent=1 // pred_region
      _
    $region13: #{transformer_lm_forward.21} parent=1 // pred_fallthru
      _
    %p16 = scmp.eq.s32.totalorder 0, 0
    // Predicated region
    $region14: #{transformer_lm_forward.21} parent=1 // pred_check
      %p17 = pneg %p16
    $region15: #{transformer_lm_forward.21} parent=1 // pred_check_branch
      %19 = sbr.rel (%p17) target = $region17
    $region16: #{transformer_lm_forward.21} parent=1 // pred_region
      %v20 = vld [vmem:[%s0] sm:$0xf]
      %v21 = vld [vmem:[%s0 + $0x4] sm:$0xf]
      %v22 = vunpack.c.l.bf16 %v20
      %v23 = vunpack.c.l.bf16 %v21
      %v24 = vmul.f32 %v22, %v22
      %v25 = vmul.f32 %v23, %v23
      %vm26 = vcmask 261120
      %v27 = vsel %vm26, %v24, 0.0
      %28 = vadd.xlane.f32.xlu0 %v27
      %v29 = vpop.xlane.xlu0 %28
      %v30 = vsel %vm26, %v25, 0.0
      %31 = vadd.xlane.f32.xlu0 %v30
      %v32 = vpop.xlane.xlu0 %31
      %v33 = vrcp.pop 32.0
      %v34 = vmul.f32 %v29, %v33
      %v35 = vmul.f32 %v32, %v33
      %v36 = vadd.f32 %v34, 1e-05
      %v37 = vadd.f32 %v35, 1e-05
      %v38 = vrsqrt.pop %v36
      %v39 = vrsqrt.pop %v37
      %v40 = vmul.f32 %v22, %v38
      %v41 = vmul.f32 %v23, %v39
      %v42 = vld [vmem:[%s1] sm:$0x1]
      %v44 = vlaneseq
      %v45 = vshrl.u32 %v44, 7
      %v46 = vsub.s32 0, %v45
      %v47 = vrot.slane %v42, %v46
      %v49 = vmul.f32 %v40, %v47
      %v50 = vmul.f32 %v41, %v47
      %v51 = vpack.c.bf16 %v50, %v49
      %52 = vst.msk [vmem:[#allocation2] sm:$0xff] %vm26, %v51
    $region17: #{transformer_lm_forward.21} parent=1 // pred_fallthru
      _
    %v53 = vld [vmem:[#allocation2] sm:$0xff]
    %v54 = vld [vmem:[%s2] sm:$0xf]
    %v55 = vld [vmem:[%s2 + $0x4] sm:$0xf]
    %v56 = vld [vmem:[%s2 + $0x8] sm:$0xf]
    %v57 = vld [vmem:[%s2 + $0xc] sm:$0xf]
    %v62 = vunpack.c.l.b16 %v54
    %v63 = vunpack.c.l.b16 %v55
    %v64 = vunpack.c.l.b16 %v56
    %v65 = vunpack.c.l.b16 %v57
    %v66 = vpack.c.b16 %v63, %v62
    %v67 = vpack.c.b16 %v65, %v64
    %vm70 = vcmask 261120
    %v72 = vsel %vm70, %v53, 0
    %74 = vmatprep.subr.bf16.mxu0 0
    %75 = vmatpush1.bf16.msra.mxu0 %v66
    %76 = vmatprep.subr.bf16.mxu0 0
    %77 = vmatpush1.bf16.msra.mxu0 %v67
    %78 = vmatprep.subr.bf16.mxu0 0
    %79 = vmatpush1.bf16.msra.mxu0 0
    %80 = vmatprep.subr.bf16.mxu0 0
    %81 = vmatpush1.bf16.msra.mxu0 0
    %82 = vmatprep.subr.bf16.mxu0 0
    %83 = vmatpush1.bf16.msra.mxu0 0
    %84 = vmatprep.subr.bf16.mxu0 0
    %85 = vmatpush1.bf16.msra.mxu0 0
    %86 = vmatprep.subr.bf16.mxu0 0
    %87 = vmatpush1.bf16.msra.mxu0 0
    %88 = vmatprep.subr.bf16.mxu0 0
    %89 = vmatpush1.bf16.msra.mxu0 0
    %90 = vmatprep.subr.bf16.mxu0 0
    %91 = vmatpush1.bf16.msra.mxu0 0
    %92 = vmatprep.subr.bf16.mxu0 0
    %93 = vmatpush1.bf16.msra.mxu0 0
    %94 = vmatprep.subr.bf16.mxu0 0
    %95 = vmatpush1.bf16.msra.mxu0 0
    %96 = vmatprep.subr.bf16.mxu0 0
    %97 = vmatpush1.bf16.msra.mxu0 0
    %98 = vmatprep.subr.bf16.mxu0 0
    %99 = vmatpush1.bf16.msra.mxu0 0
    %100 = vmatprep.subr.bf16.mxu0 0
    %101 = vmatpush1.bf16.msra.mxu0 0
    %102 = vmatprep.subr.bf16.mxu0 0
    %103 = vmatpush1.bf16.msra.mxu0 0
    %104 = vmatprep.subr.bf16.mxu0 0
    %105 = vmatpush1.bf16.msra.mxu0 0
    %106 = vmatprep.mubr.bf16.mxu0 0
    %107 = vmatmul.mubr.bf16.gmra.mrb[0].mxu0 %v72
    %v108 = vpop.f32.mrb[0].mxu0
    %v109 = vadd.f32 0.0, %v108
    %v110 = vpop.f32.mrb[0].mxu0
    %v111 = vpop.f32.mrb[0].mxu0
    %v112 = vadd.f32 0.0, %v111
    %v113 = vpop.f32.mrb[0].mxu0
    %114 = vdwg.mxu0
    %vm115 = vcmask 523264
    %116 = vst.msk [vmem:[#allocation3] sm:$0xff] %vm115, %v109
    %117 = vst.msk [vmem:[#allocation3 + $0x8] sm:$0xff] %vm115, %v112
    // Predicated region
    $region18: #{transformer_lm_forward.21} parent=1 // pred_check
      _
    $region19: #{transformer_lm_forward.21} parent=1 // pred_check_branch
      %119 = sbr.rel (0) target = $region21
    $region20: #{transformer_lm_forward.21} parent=1 // pred_region
      %s121 = ssub.s32 256, 256
      %122 = vsyncadd [#allocation4], %s121
      %s123 = sshll.u32 [#allocation3], 4
      %s124 = int_to_ptr.vmem [resolvable:$true] %s123
      %129 = dma.vmem_to_hbm [thread:$0]  %s124, 256, %s3, [#allocation4], 128, 128, 8
    $region21: #{transformer_lm_forward.21} parent=1 // pred_fallthru
      _
    // Predicated region
    $region22: #{transformer_lm_forward.21} parent=1 // pred_check
      _
    $region23: #{transformer_lm_forward.21} parent=1 // pred_check_branch
      %131 = sbr.rel (0) target = $region25
    $region24: #{transformer_lm_forward.21} parent=1 // pred_region
      %132 = dma.done [#allocation4], 256
    $region25: #{transformer_lm_forward.21} parent=1 // pred_fallthru
      _
    %133 = vsyncpa [#allocation4], 1

</llo_original>
